<compile_context>
chip_gen: v7x
topology: tpu7x:2x2x1
jax: 0.10.0
libtpu: 0.0.40
codegen_flags: <defaults>
</compile_context>

<pallas_src>
import functools

import jax
import jax.numpy as jnp
from jax import lax
from jax.experimental import pallas as pl
from jax.experimental.pallas import tpu as pltpu


def _round_up(x, m):
    return ((x + m - 1) // m) * m


def _pick_batch_block(N, out_pad, lanes_target=512):
    """Images per grid step: enough for ~512 dense lanes, but keep >=2 grid steps
    (so both v7x TensorCores get work when batch allows) and divide N evenly."""
    nb = max(1, min(N, -(-lanes_target // out_pad)))
    if N >= 2:
        nb = max(1, min(nb, N // 2))
    while N % nb:
        nb -= 1
    return nb


def _resblock_kernel(x_ref, w1_ref, b1_ref, w2_ref, b2_ref, mask_ref, o_ref,
                     ypad_ref, *, K, Wp, OUT_pad, OFF, SRC_Y, res_scale, nb):
    """Fused ResBlock body for one block of `nb` batch elements.

    x_ref:    (nb, C, SRC)        f32, zero-padded image flattened row-major (Wp cols)
    w1_ref:   (C, K*K*C)          conv1 weights, tap-major / channel-minor (MXU dtype)
    b1_ref:   (C, 1)              conv1 bias (f32)
    w2_ref:   (C, K*K*C)          conv2 weights
    b2_ref:   (C, 1)              conv2 bias (f32)
    mask_ref: (1, nb*OUT_pad)     1.0 on real pixel columns, 0.0 on wrap/tail columns
    o_ref:    (nb, C, OUT_pad)    lane-dense, 128-aligned output
    ypad_ref: (C, nb*SRC_Y)       MXU-dtype VMEM scratch: re-padded conv1 activation
    """
    C = w1_ref.shape[0]
    taps = [kh * Wp + kw for kh in range(K) for kw in range(K)]
    center = (K // 2) * (Wp + 1)
    mxu_dtype = w1_ref.dtype

    # ---- conv1: cast to MXU dtype FIRST, then im2col = pure lane-shifted slices ----
    cols1_parts = []
    for n in range(nb):
        xb = x_ref[n].astype(mxu_dtype)                      # one cast of (C, SRC)
        cols1_parts.append(
            jnp.concatenate([xb[:, t:t + OUT_pad] for t in taps], axis=0))
    cols1 = jnp.concatenate(cols1_parts, axis=1)             # (K*K*C, nb*OUT_pad)

    y1 = jnp.dot(w1_ref[...], cols1, preferred_element_type=jnp.float32)
    # bias + ReLU in f32; mask wrap/tail columns so they become conv2's zero halo
    y1 = jnp.maximum(y1 + b1_ref[...], 0.0) * mask_ref[...]

    # ---- re-pad intermediate inside VMEM (MXU dtype, lane-aligned stores) ----
    y1c = y1.astype(mxu_dtype)
    left_halo = OFF
    right_halo = SRC_Y - OFF - OUT_pad
    zl = jnp.zeros((C, left_halo), mxu_dtype) if left_halo > 0 else None
    zr = jnp.zeros((C, right_halo), mxu_dtype) if right_halo > 0 else None
    for n in range(nb):
        s = n * SRC_Y
        if left_halo > 0:
            ypad_ref[:, s:s + OFF] = zl
        if right_halo > 0:
            ypad_ref[:, s + OFF + OUT_pad:s + SRC_Y] = zr
        ypad_ref[:, s + OFF:s + OFF + OUT_pad] = y1c[:, n * OUT_pad:(n + 1) * OUT_pad]

    # ---- conv2 (+ bias); tap origins shifted by the aligned scratch offset ----
    cols2_parts = []
    for n in range(nb):
        base = n * SRC_Y + OFF - center
        cols2_parts.append(jnp.concatenate(
            [ypad_ref[:, base + t:base + t + OUT_pad] for t in taps], axis=0))
    cols2 = jnp.concatenate(cols2_parts, axis=1)             # (K*K*C, nb*OUT_pad)

    y2 = jnp.dot(w2_ref[...], cols2, preferred_element_type=jnp.float32) + b2_ref[...]
    if res_scale != 1.0:                                     # static skip when == 1.0
        y2 = y2 * res_scale

    # ---- residual: out = body(x) * res_scale + x ; aligned full-lane stores ----
    for n in range(nb):
        xres = x_ref[n][:, center:center + OUT_pad]          # f32 residual
        o_ref[n] = (y2[:, n * OUT_pad:(n + 1) * OUT_pad] + xres).astype(o_ref.dtype)


def resblock_forward(x_nchw, w1_oihw, b1, w2_oihw, b2, *,
                     res_scale=1.0, mxu_dtype=jnp.bfloat16, batch_block=None):
    """ResBlock.forward (bn=False, act=ReLU): conv -> ReLU -> conv, *res_scale, +x.

    x_nchw: (N, C, H, W) PyTorch layout; weights in PyTorch OIHW layout.
    """
    N, C, H, W = x_nchw.shape
    Cout, Cin, K, K2 = w1_oihw.shape
    assert Cout == Cin == C and K == K2 and K % 2 == 1

    pad = K // 2
    Hp, Wp = H + 2 * pad, W + 2 * pad
    center = pad * (Wp + 1)
    max_tap = (K - 1) * (Wp + 1)

    OUT = H * Wp                                  # real flattened output length
    OUT_pad = _round_up(max(OUT, 128), 128)       # 128-aligned lane-dense length
    # Padded-flat input length: enough bottom zero rows that every conv1 tap and the
    # residual slice stay in bounds (VMEM OOB is unchecked, so this is mandatory).
    need = OUT_pad + max_tap
    extra_rows = max(0, -(-(need - Hp * Wp) // Wp))
    SRC = (Hp + extra_rows) * Wp

    # Lane-aligned interior offset of the re-padded conv1 activation in the scratch.
    OFF = _round_up(center, 128)
    SRC_Y = _round_up(OFF + OUT_pad + (max_tap - center), 128)

    Nb = batch_block or _pick_batch_block(N, OUT_pad)
    assert N % Nb == 0

    # Single pad op builds the padded + flat-tailed input (no pad->reshape->pad chain).
    x_flat = jnp.pad(x_nchw.astype(jnp.float32),
                     ((0, 0), (0, 0), (pad, pad + extra_rows), (pad, pad))
                     ).reshape(N, C, SRC)

    # OIHW -> (Cout, K*K*Cin), tap-major / channel-minor (matches in-kernel im2col).
    w1m = jnp.transpose(w1_oihw, (0, 2, 3, 1)).reshape(C, K * K * C).astype(mxu_dtype)
    w2m = jnp.transpose(w2_oihw, (0, 2, 3, 1)).reshape(C, K * K * C).astype(mxu_dtype)
    b1c = b1.reshape(C, 1).astype(jnp.float32)
    b2c = b2.reshape(C, 1).astype(jnp.float32)

    # 1.0 on real pixel columns, 0.0 on row-wrap columns and the OUT->OUT_pad tail.
    q = jnp.arange(OUT_pad, dtype=jnp.int32)
    mask1 = ((q % Wp < W) & (q < OUT)).astype(jnp.float32).reshape(1, OUT_pad)
    mask = jnp.tile(mask1, (1, Nb))

    kernel = functools.partial(_resblock_kernel, K=K, Wp=Wp, OUT_pad=OUT_pad,
                               OFF=OFF, SRC_Y=SRC_Y,
                               res_scale=float(res_scale), nb=Nb)

    itemsize_w = jnp.dtype(mxu_dtype).itemsize
    flops = N * (2 * (2 * C * (K * K * C) * OUT_pad) + 6 * C * OUT_pad)
    bytes_accessed = int(x_flat.size * 4 + N * C * OUT_pad * 4
                         + (w1m.size + w2m.size) * itemsize_w
                         + (b1c.size + b2c.size + mask.size) * 4)

    out_flat = pl.pallas_call(
        kernel,
        out_shape=jax.ShapeDtypeStruct((N, C, OUT_pad), x_nchw.dtype),
        grid_spec=pltpu.PrefetchScalarGridSpec(
            num_scalar_prefetch=0,
            grid=(N // Nb,),
            in_specs=[
                pl.BlockSpec((Nb, C, SRC), lambda b: (b, 0, 0)),       # padded-flat x
                pl.BlockSpec((C, K * K * C), lambda b: (0, 0)),        # w1
                pl.BlockSpec((C, 1), lambda b: (0, 0)),                # b1
                pl.BlockSpec((C, K * K * C), lambda b: (0, 0)),        # w2
                pl.BlockSpec((C, 1), lambda b: (0, 0)),                # b2
                pl.BlockSpec((1, Nb * OUT_pad), lambda b: (0, 0)),     # column mask
            ],
            out_specs=pl.BlockSpec((Nb, C, OUT_pad), lambda b: (b, 0, 0)),
            scratch_shapes=[pltpu.VMEM((C, Nb * SRC_Y), mxu_dtype)],   # padded conv1 act
        ),
        compiler_params=pltpu.CompilerParams(
            dimension_semantics=("parallel",),
            vmem_limit_bytes=64 * 1024 * 1024,
        ),
        cost_estimate=pl.CostEstimate(flops=flops, transcendentals=0,
                                      bytes_accessed=bytes_accessed),
    )(x_flat, w1m, b1c, w2m, b2c, mask)

    # (N, C, OUT_pad) -> drop tail -> (N, C, H, Wp) -> drop wrap columns.
    return out_flat[:, :, :OUT].reshape(N, C, H, Wp)[:, :, :, :W]


def _reference_forward(x, w1_oihw, b1, w2_oihw, b2, *, K, res_scale):
    """Pure-JAX reference matching the PyTorch ResBlock semantics."""
    pad = K // 2
    dn = lax.conv_dimension_numbers(x.shape, w1_oihw.shape, ("NCHW", "OIHW", "NCHW"))

    def conv(v, w, b):
        y = lax.conv_general_dilated(v, w, (1, 1), ((pad, pad), (pad, pad)),
                                     dimension_numbers=dn,
                                     precision=lax.Precision.HIGHEST)
        return y + b[None, :, None, None]

    res = conv(jnp.maximum(conv(x, w1_oihw, b1), 0.0), w2_oihw, b2)
    return res * res_scale + x


if __name__ == "__main__":
    # ResBlock(default_conv, n_feat=8, kernel_size=3), batch=4, spatial 16x16.
    N, C, H, W, K = 4, 8, 16, 16, 3

    key = jax.random.PRNGKey(0)
    kx, kw1, kb1, kw2, kb2 = jax.random.split(key, 5)
    x = jax.random.normal(kx, (N, C, H, W), jnp.float32)
    w1 = jax.random.normal(kw1, (C, C, K, K), jnp.float32) * 0.1   # OIHW (PyTorch)
    b1 = jax.random.normal(kb1, (C,), jnp.float32) * 0.1
    w2 = jax.random.normal(kw2, (C, C, K, K), jnp.float32) * 0.1
    b2 = jax.random.normal(kb2, (C,), jnp.float32) * 0.1

    ref = jax.block_until_ready(
        _reference_forward(x, w1, b1, w2, b2, K=K, res_scale=1.0))

    # bf16-fed MXU (recommended on v5e/v6e/v7x), f32 accumulation + f32 epilogue math.
    fwd_bf16 = jax.jit(functools.partial(resblock_forward,
                                         res_scale=1.0, mxu_dtype=jnp.bfloat16))
    out_bf16 = jax.block_until_ready(fwd_bf16(x, w1, b1, w2, b2))
    assert out_bf16.shape == (N, C, H, W)
    assert jnp.allclose(out_bf16, ref, atol=7.5e-2, rtol=7.5e-2)

    # f32-fed MXU path (tighter numerics; note TPU f32 matmul is still multi-pass bf16).
    fwd_f32 = jax.jit(functools.partial(resblock_forward,
                                        res_scale=1.0, mxu_dtype=jnp.float32))
    out_f32 = jax.block_until_ready(fwd_f32(x, w1, b1, w2, b2))
    assert out_f32.shape == (N, C, H, W)
    assert jnp.allclose(out_f32, ref, atol=2e-2, rtol=2e-2)

    # Exercise the res_scale != 1.0 branch.
    ref_s = jax.block_until_ready(
        _reference_forward(x, w1, b1, w2, b2, K=K, res_scale=0.5))
    fwd_s = jax.jit(functools.partial(resblock_forward,
                                      res_scale=0.5, mxu_dtype=jnp.float32))
    out_s = jax.block_until_ready(fwd_s(x, w1, b1, w2, b2))
    assert jnp.allclose(out_s, ref_s, atol=2e-2, rtol=2e-2)

    print("KERNEL_OK")
</pallas_src>

<mosaic_0001>
module attributes {stable_mosaic.version = 11 : i64} {
  func.func @_resblock_kernel(%arg0: i32, %arg1: memref<2x8x432xf32, #tpu.memory_space<vmem>>, %arg2: memref<8x72xbf16, #tpu.memory_space<vmem>>, %arg3: memref<8x1xf32, #tpu.memory_space<vmem>>, %arg4: memref<8x72xbf16, #tpu.memory_space<vmem>>, %arg5: memref<8x1xf32, #tpu.memory_space<vmem>>, %arg6: memref<1x768xf32, #tpu.memory_space<vmem>>, %arg7: memref<2x8x384xf32, #tpu.memory_space<vmem>>, %arg8: memref<8x1280xbf16, #tpu.memory_space<vmem>>) attributes {dimension_semantics = [#tpu.dimension_semantics<parallel>], iteration_bounds = array<i64: 2>, scalar_prefetch = 0 : i64, scratch_operands = 1 : i64, tpu.core_type = #tpu.core_type<tc>, window_params = [{transform_indices = @transform_0, window_bounds = array<i64: 2, 8, 432>}, {pipeline_mode = #tpu.pipeline_mode<synchronous>, transform_indices = @transform_1, window_bounds = array<i64: 8, 72>}, {pipeline_mode = #tpu.pipeline_mode<synchronous>, transform_indices = @transform_2, window_bounds = array<i64: 8, 1>}, {pipeline_mode = #tpu.pipeline_mode<synchronous>, transform_indices = @transform_3, window_bounds = array<i64: 8, 72>}, {pipeline_mode = #tpu.pipeline_mode<synchronous>, transform_indices = @transform_4, window_bounds = array<i64: 8, 1>}, {pipeline_mode = #tpu.pipeline_mode<synchronous>, transform_indices = @transform_5, window_bounds = array<i64: 1, 768>}, {transform_indices = @transform_6, window_bounds = array<i64: 2, 8, 384>}]} {
    %c0 = arith.constant 0 : index
    %c0_0 = arith.constant 0 : index
    %c0_1 = arith.constant 0 : index
    %0 = vector.load %arg1[%c0, %c0_0, %c0_1] : memref<2x8x432xf32, #tpu.memory_space<vmem>>, vector<1x8x432xf32>
    %1 = vector.shape_cast %0 : vector<1x8x432xf32> to vector<8x432xf32>
    %2 = arith.truncf %1 : vector<8x432xf32> to vector<8x432xbf16>
    %3 = vector.extract_strided_slice %2 {offsets = [0, 0], sizes = [8, 384], strides = [1, 1]} : vector<8x432xbf16> to vector<8x384xbf16>
    %4 = vector.extract_strided_slice %2 {offsets = [0, 1], sizes = [8, 384], strides = [1, 1]} : vector<8x432xbf16> to vector<8x384xbf16>
    %5 = vector.extract_strided_slice %2 {offsets = [0, 2], sizes = [8, 384], strides = [1, 1]} : vector<8x432xbf16> to vector<8x384xbf16>
    %6 = vector.extract_strided_slice %2 {offsets = [0, 18], sizes = [8, 384], strides = [1, 1]} : vector<8x432xbf16> to vector<8x384xbf16>
    %7 = vector.extract_strided_slice %2 {offsets = [0, 19], sizes = [8, 384], strides = [1, 1]} : vector<8x432xbf16> to vector<8x384xbf16>
    %8 = vector.extract_strided_slice %2 {offsets = [0, 20], sizes = [8, 384], strides = [1, 1]} : vector<8x432xbf16> to vector<8x384xbf16>
    %9 = vector.extract_strided_slice %2 {offsets = [0, 36], sizes = [8, 384], strides = [1, 1]} : vector<8x432xbf16> to vector<8x384xbf16>
    %10 = vector.extract_strided_slice %2 {offsets = [0, 37], sizes = [8, 384], strides = [1, 1]} : vector<8x432xbf16> to vector<8x384xbf16>
    %11 = vector.extract_strided_slice %2 {offsets = [0, 38], sizes = [8, 384], strides = [1, 1]} : vector<8x432xbf16> to vector<8x384xbf16>
    %12 = tpu.concatenate %3, %4, %5, %6, %7, %8, %9, %10, %11 in 0 : vector<8x384xbf16>, vector<8x384xbf16>, vector<8x384xbf16>, vector<8x384xbf16>, vector<8x384xbf16>, vector<8x384xbf16>, vector<8x384xbf16>, vector<8x384xbf16>, vector<8x384xbf16> -> vector<72x384xbf16>
    %c1 = arith.constant 1 : index
    %c0_2 = arith.constant 0 : index
    %c0_3 = arith.constant 0 : index
    %13 = vector.load %arg1[%c1, %c0_2, %c0_3] : memref<2x8x432xf32, #tpu.memory_space<vmem>>, vector<1x8x432xf32>
    %14 = vector.shape_cast %13 : vector<1x8x432xf32> to vector<8x432xf32>
    %15 = arith.truncf %14 : vector<8x432xf32> to vector<8x432xbf16>
    %16 = vector.extract_strided_slice %15 {offsets = [0, 0], sizes = [8, 384], strides = [1, 1]} : vector<8x432xbf16> to vector<8x384xbf16>
    %17 = vector.extract_strided_slice %15 {offsets = [0, 1], sizes = [8, 384], strides = [1, 1]} : vector<8x432xbf16> to vector<8x384xbf16>
    %18 = vector.extract_strided_slice %15 {offsets = [0, 2], sizes = [8, 384], strides = [1, 1]} : vector<8x432xbf16> to vector<8x384xbf16>
    %19 = vector.extract_strided_slice %15 {offsets = [0, 18], sizes = [8, 384], strides = [1, 1]} : vector<8x432xbf16> to vector<8x384xbf16>
    %20 = vector.extract_strided_slice %15 {offsets = [0, 19], sizes = [8, 384], strides = [1, 1]} : vector<8x432xbf16> to vector<8x384xbf16>
    %21 = vector.extract_strided_slice %15 {offsets = [0, 20], sizes = [8, 384], strides = [1, 1]} : vector<8x432xbf16> to vector<8x384xbf16>
    %22 = vector.extract_strided_slice %15 {offsets = [0, 36], sizes = [8, 384], strides = [1, 1]} : vector<8x432xbf16> to vector<8x384xbf16>
    %23 = vector.extract_strided_slice %15 {offsets = [0, 37], sizes = [8, 384], strides = [1, 1]} : vector<8x432xbf16> to vector<8x384xbf16>
    %24 = vector.extract_strided_slice %15 {offsets = [0, 38], sizes = [8, 384], strides = [1, 1]} : vector<8x432xbf16> to vector<8x384xbf16>
    %25 = tpu.concatenate %16, %17, %18, %19, %20, %21, %22, %23, %24 in 0 : vector<8x384xbf16>, vector<8x384xbf16>, vector<8x384xbf16>, vector<8x384xbf16>, vector<8x384xbf16>, vector<8x384xbf16>, vector<8x384xbf16>, vector<8x384xbf16>, vector<8x384xbf16> -> vector<72x384xbf16>
    %26 = tpu.concatenate %12, %25 in 1 : vector<72x384xbf16>, vector<72x384xbf16> -> vector<72x768xbf16>
    %c0_4 = arith.constant 0 : index
    %c0_5 = arith.constant 0 : index
    %27 = vector.load %arg2[%c0_4, %c0_5] : memref<8x72xbf16, #tpu.memory_space<vmem>>, vector<8x72xbf16>
    %cst = arith.constant dense<0.000000e+00> : vector<8x768xf32>
    %28 = tpu.matmul %27, %26, %cst {dimension_numbers = #tpu.dot_dimension_numbers<[1], [0], [0], [1], [0, 0, 1, 1], [], []>} : vector<8x72xbf16>, vector<72x768xbf16>, vector<8x768xf32> -> vector<8x768xf32>
    %c0_6 = arith.constant 0 : index
    %c0_7 = arith.constant 0 : index
    %29 = vector.load %arg3[%c0_6, %c0_7] : memref<8x1xf32, #tpu.memory_space<vmem>>, vector<8x1xf32>
    %30 = vector.broadcast %29 : vector<8x1xf32> to vector<8x768xf32>
    %31 = arith.addf %28, %30 : vector<8x768xf32>
    %cst_8 = arith.constant 0.000000e+00 : f32
    %32 = vector.broadcast %cst_8 : f32 to vector<8x768xf32>
    %33 = arith.maximumf %31, %32 : vector<8x768xf32>
    %c0_9 = arith.constant 0 : index
    %c0_10 = arith.constant 0 : index
    %34 = vector.load %arg6[%c0_9, %c0_10] : memref<1x768xf32, #tpu.memory_space<vmem>>, vector<1x768xf32>
    %35 = vector.broadcast %34 : vector<1x768xf32> to vector<8x768xf32>
    %36 = arith.mulf %33, %35 : vector<8x768xf32>
    %37 = arith.truncf %36 : vector<8x768xf32> to vector<8x768xbf16>
    %cst_11 = arith.constant 0.000000e+00 : bf16
    %38 = vector.broadcast %cst_11 : bf16 to vector<8x128xbf16>
    %cst_12 = arith.constant 0.000000e+00 : bf16
    %39 = vector.broadcast %cst_12 : bf16 to vector<8x128xbf16>
    %c0_13 = arith.constant 0 : index
    %c0_14 = arith.constant 0 : index
    %40 = vector.load %arg8[%c0_13, %c0_14] : memref<8x1280xbf16, #tpu.memory_space<vmem>>, vector<8x128xbf16>
    tpu.vector_store %arg8[%c0_13, %c0_14], %38 {strides = array<i32>} : memref<8x1280xbf16, #tpu.memory_space<vmem>>, vector<8x128xbf16>,
    %c0_15 = arith.constant 0 : index
    %c512 = arith.constant 512 : index
    %41 = vector.load %arg8[%c0_15, %c512] : memref<8x1280xbf16, #tpu.memory_space<vmem>>, vector<8x128xbf16>
    tpu.vector_store %arg8[%c0_15, %c512], %39 {strides = array<i32>} : memref<8x1280xbf16, #tpu.memory_space<vmem>>, vector<8x128xbf16>,
    %42 = vector.extract_strided_slice %37 {offsets = [0, 0], sizes = [8, 384], strides = [1, 1]} : vector<8x768xbf16> to vector<8x384xbf16>
    %c0_16 = arith.constant 0 : index
    %c128 = arith.constant 128 : index
    %43 = vector.load %arg8[%c0_16, %c128] : memref<8x1280xbf16, #tpu.memory_space<vmem>>, vector<8x384xbf16>
    tpu.vector_store %arg8[%c0_16, %c128], %42 {strides = array<i32>} : memref<8x1280xbf16, #tpu.memory_space<vmem>>, vector<8x384xbf16>,
    %c0_17 = arith.constant 0 : index
    %c640 = arith.constant 640 : index
    %44 = vector.load %arg8[%c0_17, %c640] : memref<8x1280xbf16, #tpu.memory_space<vmem>>, vector<8x128xbf16>
    tpu.vector_store %arg8[%c0_17, %c640], %38 {strides = array<i32>} : memref<8x1280xbf16, #tpu.memory_space<vmem>>, vector<8x128xbf16>,
    %c0_18 = arith.constant 0 : index
    %c1152 = arith.constant 1152 : index
    %45 = vector.load %arg8[%c0_18, %c1152] : memref<8x1280xbf16, #tpu.memory_space<vmem>>, vector<8x128xbf16>
    tpu.vector_store %arg8[%c0_18, %c1152], %39 {strides = array<i32>} : memref<8x1280xbf16, #tpu.memory_space<vmem>>, vector<8x128xbf16>,
    %46 = vector.extract_strided_slice %37 {offsets = [0, 384], sizes = [8, 384], strides = [1, 1]} : vector<8x768xbf16> to vector<8x384xbf16>
    %c0_19 = arith.constant 0 : index
    %c768 = arith.constant 768 : index
    %47 = vector.load %arg8[%c0_19, %c768] : memref<8x1280xbf16, #tpu.memory_space<vmem>>, vector<8x384xbf16>
    tpu.vector_store %arg8[%c0_19, %c768], %46 {strides = array<i32>} : memref<8x1280xbf16, #tpu.memory_space<vmem>>, vector<8x384xbf16>,
    %c0_20 = arith.constant 0 : index
    %c109 = arith.constant 109 : index
    %48 = vector.load %arg8[%c0_20, %c109] : memref<8x1280xbf16, #tpu.memory_space<vmem>>, vector<8x384xbf16>
    %c0_21 = arith.constant 0 : index
    %c110 = arith.constant 110 : index
    %49 = vector.load %arg8[%c0_21, %c110] : memref<8x1280xbf16, #tpu.memory_space<vmem>>, vector<8x384xbf16>
    %c0_22 = arith.constant 0 : index
    %c111 = arith.constant 111 : index
    %50 = vector.load %arg8[%c0_22, %c111] : memref<8x1280xbf16, #tpu.memory_space<vmem>>, vector<8x384xbf16>
    %c0_23 = arith.constant 0 : index
    %c127 = arith.constant 127 : index
    %51 = vector.load %arg8[%c0_23, %c127] : memref<8x1280xbf16, #tpu.memory_space<vmem>>, vector<8x384xbf16>
    %c0_24 = arith.constant 0 : index
    %c128_25 = arith.constant 128 : index
    %52 = vector.load %arg8[%c0_24, %c128_25] : memref<8x1280xbf16, #tpu.memory_space<vmem>>, vector<8x384xbf16>
    %c0_26 = arith.constant 0 : index
    %c129 = arith.constant 129 : index
    %53 = vector.load %arg8[%c0_26, %c129] : memref<8x1280xbf16, #tpu.memory_space<vmem>>, vector<8x384xbf16>
    %c0_27 = arith.constant 0 : index
    %c145 = arith.constant 145 : index
    %54 = vector.load %arg8[%c0_27, %c145] : memref<8x1280xbf16, #tpu.memory_space<vmem>>, vector<8x384xbf16>
    %c0_28 = arith.constant 0 : index
    %c146 = arith.constant 146 : index
    %55 = vector.load %arg8[%c0_28, %c146] : memref<8x1280xbf16, #tpu.memory_space<vmem>>, vector<8x384xbf16>
    %c0_29 = arith.constant 0 : index
    %c147 = arith.constant 147 : index
    %56 = vector.load %arg8[%c0_29, %c147] : memref<8x1280xbf16, #tpu.memory_space<vmem>>, vector<8x384xbf16>
    %57 = tpu.concatenate %48, %49, %50, %51, %52, %53, %54, %55, %56 in 0 : vector<8x384xbf16>, vector<8x384xbf16>, vector<8x384xbf16>, vector<8x384xbf16>, vector<8x384xbf16>, vector<8x384xbf16>, vector<8x384xbf16>, vector<8x384xbf16>, vector<8x384xbf16> -> vector<72x384xbf16>
    %c0_30 = arith.constant 0 : index
    %c749 = arith.constant 749 : index
    %58 = vector.load %arg8[%c0_30, %c749] : memref<8x1280xbf16, #tpu.memory_space<vmem>>, vector<8x384xbf16>
    %c0_31 = arith.constant 0 : index
    %c750 = arith.constant 750 : index
    %59 = vector.load %arg8[%c0_31, %c750] : memref<8x1280xbf16, #tpu.memory_space<vmem>>, vector<8x384xbf16>
    %c0_32 = arith.constant 0 : index
    %c751 = arith.constant 751 : index
    %60 = vector.load %arg8[%c0_32, %c751] : memref<8x1280xbf16, #tpu.memory_space<vmem>>, vector<8x384xbf16>
    %c0_33 = arith.constant 0 : index
    %c767 = arith.constant 767 : index
    %61 = vector.load %arg8[%c0_33, %c767] : memref<8x1280xbf16, #tpu.memory_space<vmem>>, vector<8x384xbf16>
    %c0_34 = arith.constant 0 : index
    %c768_35 = arith.constant 768 : index
    %62 = vector.load %arg8[%c0_34, %c768_35] : memref<8x1280xbf16, #tpu.memory_space<vmem>>, vector<8x384xbf16>
    %c0_36 = arith.constant 0 : index
    %c769 = arith.constant 769 : index
    %63 = vector.load %arg8[%c0_36, %c769] : memref<8x1280xbf16, #tpu.memory_space<vmem>>, vector<8x384xbf16>
    %c0_37 = arith.constant 0 : index
    %c785 = arith.constant 785 : index
    %64 = vector.load %arg8[%c0_37, %c785] : memref<8x1280xbf16, #tpu.memory_space<vmem>>, vector<8x384xbf16>
    %c0_38 = arith.constant 0 : index
    %c786 = arith.constant 786 : index
    %65 = vector.load %arg8[%c0_38, %c786] : memref<8x1280xbf16, #tpu.memory_space<vmem>>, vector<8x384xbf16>
    %c0_39 = arith.constant 0 : index
    %c787 = arith.constant 787 : index
    %66 = vector.load %arg8[%c0_39, %c787] : memref<8x1280xbf16, #tpu.memory_space<vmem>>, vector<8x384xbf16>
    %67 = tpu.concatenate %58, %59, %60, %61, %62, %63, %64, %65, %66 in 0 : vector<8x384xbf16>, vector<8x384xbf16>, vector<8x384xbf16>, vector<8x384xbf16>, vector<8x384xbf16>, vector<8x384xbf16>, vector<8x384xbf16>, vector<8x384xbf16>, vector<8x384xbf16> -> vector<72x384xbf16>
    %68 = tpu.concatenate %57, %67 in 1 : vector<72x384xbf16>, vector<72x384xbf16> -> vector<72x768xbf16>
    %c0_40 = arith.constant 0 : index
    %c0_41 = arith.constant 0 : index
    %69 = vector.load %arg4[%c0_40, %c0_41] : memref<8x72xbf16, #tpu.memory_space<vmem>>, vector<8x72xbf16>
    %cst_42 = arith.constant dense<0.000000e+00> : vector<8x768xf32>
    %70 = tpu.matmul %69, %68, %cst_42 {dimension_numbers = #tpu.dot_dimension_numbers<[1], [0], [0], [1], [0, 0, 1, 1], [], []>} : vector<8x72xbf16>, vector<72x768xbf16>, vector<8x768xf32> -> vector<8x768xf32>
    %c0_43 = arith.constant 0 : index
    %c0_44 = arith.constant 0 : index
    %71 = vector.load %arg5[%c0_43, %c0_44] : memref<8x1xf32, #tpu.memory_space<vmem>>, vector<8x1xf32>
    %72 = vector.broadcast %71 : vector<8x1xf32> to vector<8x768xf32>
    %73 = arith.addf %70, %72 : vector<8x768xf32>
    %c0_45 = arith.constant 0 : index
    %c0_46 = arith.constant 0 : index
    %c0_47 = arith.constant 0 : index
    %74 = vector.load %arg1[%c0_45, %c0_46, %c0_47] : memref<2x8x432xf32, #tpu.memory_space<vmem>>, vector<1x8x432xf32>
    %75 = vector.shape_cast %74 : vector<1x8x432xf32> to vector<8x432xf32>
    %76 = vector.extract_strided_slice %75 {offsets = [0, 19], sizes = [8, 384], strides = [1, 1]} : vector<8x432xf32> to vector<8x384xf32>
    %77 = vector.extract_strided_slice %73 {offsets = [0, 0], sizes = [8, 384], strides = [1, 1]} : vector<8x768xf32> to vector<8x384xf32>
    %78 = arith.addf %77, %76 : vector<8x384xf32>
    %c0_48 = arith.constant 0 : index
    %c0_49 = arith.constant 0 : index
    %c0_50 = arith.constant 0 : index
    %79 = vector.load %arg7[%c0_48, %c0_49, %c0_50] : memref<2x8x384xf32, #tpu.memory_space<vmem>>, vector<1x8x384xf32>
    %80 = vector.shape_cast %79 : vector<1x8x384xf32> to vector<8x384xf32>
    %81 = vector.shape_cast %78 : vector<8x384xf32> to vector<1x8x384xf32>
    tpu.vector_store %arg7[%c0_48, %c0_49, %c0_50], %81 {strides = array<i32>} : memref<2x8x384xf32, #tpu.memory_space<vmem>>, vector<1x8x384xf32>,
    %c1_51 = arith.constant 1 : index
    %c0_52 = arith.constant 0 : index
    %c0_53 = arith.constant 0 : index
    %82 = vector.load %arg1[%c1_51, %c0_52, %c0_53] : memref<2x8x432xf32, #tpu.memory_space<vmem>>, vector<1x8x432xf32>
    %83 = vector.shape_cast %82 : vector<1x8x432xf32> to vector<8x432xf32>
    %84 = vector.extract_strided_slice %83 {offsets = [0, 19], sizes = [8, 384], strides = [1, 1]} : vector<8x432xf32> to vector<8x384xf32>
    %85 = vector.extract_strided_slice %73 {offsets = [0, 384], sizes = [8, 384], strides = [1, 1]} : vector<8x768xf32> to vector<8x384xf32>
    %86 = arith.addf %85, %84 : vector<8x384xf32>
    %c1_54 = arith.constant 1 : index
    %c0_55 = arith.constant 0 : index
    %c0_56 = arith.constant 0 : index
    %87 = vector.load %arg7[%c1_54, %c0_55, %c0_56] : memref<2x8x384xf32, #tpu.memory_space<vmem>>, vector<1x8x384xf32>
    %88 = vector.shape_cast %87 : vector<1x8x384xf32> to vector<8x384xf32>
    %89 = vector.shape_cast %86 : vector<8x384xf32> to vector<1x8x384xf32>
    tpu.vector_store %arg7[%c1_54, %c0_55, %c0_56], %89 {strides = array<i32>} : memref<2x8x384xf32, #tpu.memory_space<vmem>>, vector<1x8x384xf32>,
    return
  }
  func.func @transform_0(%arg0: i32) -> (i32, i32, i32) {
    %c0_i32 = arith.constant 0 : i32
    %c0_i32_0 = arith.constant 0 : i32
    %c0_i32_1 = arith.constant 0 : i32
    return %arg0, %c0_i32, %c0_i32_0 : i32, i32, i32
  }
  func.func @transform_1(%arg0: i32) -> (i32, i32) {
    %c0_i32 = arith.constant 0 : i32
    %c0_i32_0 = arith.constant 0 : i32
    %c0_i32_1 = arith.constant 0 : i32
    return %c0_i32, %c0_i32_0 : i32, i32
  }
  func.func @transform_2(%arg0: i32) -> (i32, i32) {
    %c0_i32 = arith.constant 0 : i32
    %c0_i32_0 = arith.constant 0 : i32
    %c0_i32_1 = arith.constant 0 : i32
    return %c0_i32, %c0_i32_0 : i32, i32
  }
  func.func @transform_3(%arg0: i32) -> (i32, i32) {
    %c0_i32 = arith.constant 0 : i32
    %c0_i32_0 = arith.constant 0 : i32
    %c0_i32_1 = arith.constant 0 : i32
    return %c0_i32, %c0_i32_0 : i32, i32
  }
  func.func @transform_4(%arg0: i32) -> (i32, i32) {
    %c0_i32 = arith.constant 0 : i32
    %c0_i32_0 = arith.constant 0 : i32
    %c0_i32_1 = arith.constant 0 : i32
    return %c0_i32, %c0_i32_0 : i32, i32
  }
  func.func @transform_5(%arg0: i32) -> (i32, i32) {
    %c0_i32 = arith.constant 0 : i32
    %c0_i32_0 = arith.constant 0 : i32
    %c0_i32_1 = arith.constant 0 : i32
    return %c0_i32, %c0_i32_0 : i32, i32
  }
  func.func @transform_6(%arg0: i32) -> (i32, i32, i32) {
    %c0_i32 = arith.constant 0 : i32
    %c0_i32_0 = arith.constant 0 : i32
    %c0_i32_1 = arith.constant 0 : i32
    return %arg0, %c0_i32, %c0_i32_0 : i32, i32, i32
  }
}

</mosaic_0001>

<llo_original>
// kernel: resblock_forward.1
$region0: #{resblock_forward.1}
  #allocation0 [shape = 'u32[]', space=smem, size = 0x4, offset = 0x4, fixed_abs, tag = 'smem constant byte address 0x4 - core index']
  #allocation1 [shape = 'u32[144,128]{1,0:T(1,128)}', space=vmem, size = 0x12000, scoped, tag = 'internal scratch']
  #allocation2 [shape = 'bf16[8,1280]{1,0:T(8,128)(2,1)}', space=vmem, size = 0x5000, scoped, tag = 'scratch operand']
  %s0 = inlined_call_operand.hbm [shape: f32[4,8,432], index: 0, kind: input, shape index: {}]
  %s1 = inlined_call_operand.hbm [shape: bf16[8,72], index: 1, kind: input, shape index: {}]
  %s2 = inlined_call_operand.hbm [shape: f32[8,1], index: 2, kind: input, shape index: {}]
  %s3 = inlined_call_operand.hbm [shape: bf16[8,72], index: 3, kind: input, shape index: {}]
  %s4 = inlined_call_operand.hbm [shape: f32[8,1], index: 4, kind: input, shape index: {}]
  %s5 = inlined_call_operand.hbm [shape: f32[1,768], index: 5, kind: input, shape index: {}]
  %s6 = inlined_call_operand.hbm [shape: f32[4,8,384], index: 6, kind: output, shape index: {}]
  %s7 = sld [smem:[#allocation0]]
  $region81: #{resblock_forward.1} parent=0
    _
  %s9 = ssub.s32 1, %s7
  %s10 = scalar_select 0, %s9, %s7
  $region1: #{resblock_forward.1} parent=0
    #allocation3 [shape = 'u8[65536]{0}', space=vmem, size = 0x10000, scoped, tag = 'input window, operand 0']
    #allocation4 [shape = 's32[2]{0}', space=sflag, size = 0x8, scoped, tag = 'scoped memory for resblock_forward.1']
    #allocation5 [shape = 's32[2]{0}', space=sflag, size = 0x8, scoped, tag = 'scoped memory for resblock_forward.1']
    #allocation6 [shape = 'u8[2048]{0}', space=vmem, size = 0x800, scoped, tag = 'input window, operand 1, single buffered']
    #allocation7 [shape = 's32[1]{0}', space=sflag, size = 0x4, scoped, tag = 'scoped memory for resblock_forward.1']
    #allocation8 [shape = 'u8[4096]{0}', space=vmem, size = 0x1000, scoped, tag = 'input window, operand 2, single buffered']
    #allocation9 [shape = 'u8[2048]{0}', space=vmem, size = 0x800, scoped, tag = 'input window, operand 3, single buffered']
    #allocation10 [shape = 's32[1]{0}', space=sflag, size = 0x4, scoped, tag = 'scoped memory for resblock_forward.1']
    #allocation11 [shape = 'u8[4096]{0}', space=vmem, size = 0x1000, scoped, tag = 'input window, operand 4, single buffered']
    #allocation12 [shape = 'u8[3072]{0}', space=vmem, size = 0xc00, scoped, tag = 'input window, operand 5, single buffered']
    #allocation13 [shape = 's32[1]{0}', space=sflag, size = 0x4, scoped, tag = 'scoped memory for resblock_forward.1']
    #allocation14 [shape = 'u8[49152]{0}', space=vmem, size = 0xc000, scoped, tag = 'output window, operand 0']
    %11 = vsyncpa [#allocation4], 0
    %s12 = scalar_lea.sflag [#allocation4], 1
    %13 = vsyncpa %s12, 0
    %14 = vsyncpa [#allocation7], 0
    %15 = vsyncpa [#allocation10], 0
    %16 = vsyncpa [#allocation13], 0
    %17 = vsyncpa [#allocation5], 0
    %s18 = scalar_lea.sflag [#allocation5], 1
    %19 = vsyncpa %s18, 0
    loop: start=0, step=1, limit=4
    $region2: #{resblock_forward.1} parent=1 // loop_pre_header
      _
    $region3: #{resblock_forward.1} parent=1 // loop_header
      %s21 = sphi 0, %s25
      %p22 = scmp.ge.s32.totalorder %s21, 4
      %s31 = sphi 0, %s33
      %s34 = sphi 0, %s31
      %s35 = sphi 0, %s34
      %s51 = sphi 0, %s35
      %s55 = sphi 0, %s55
      %s57 = sphi 0, %s55
      %s58 = sphi 0, %s57
      %s72 = sphi 0, %s58
      %s76 = sphi 0, %s76
      %s78 = sphi 0, %s76
      %s79 = sphi 0, %s78
      %s93 = sphi 0, %s79
      %s97 = sphi 0, %s97
      %s99 = sphi 0, %s97
      %s100 = sphi 0, %s99
      %s114 = sphi 0, %s100
      %s118 = sphi 0, %s118
      %s120 = sphi 0, %s118
      %s121 = sphi 0, %s120
      %s135 = sphi 0, %s121
      %s139 = sphi 0, %s139
      %s141 = sphi 0, %s139
      %s142 = sphi 0, %s141
      %s156 = sphi 0, %s142
      %s162 = sphi 0, %s164
      %s165 = sphi 0, %s162
      %s166 = sphi 0, %s165
      %s182 = sphi 0, %s166
    $region4: #{resblock_forward.1} parent=1 // loop_header_branch
      %24 = sbr.rel (%p22) target = $region8
    $region5: #{resblock_forward.1} parent=1 // loop_body
      %s26 = ssub.s32 %s21, 1
      %s27 = ssub.s32 %s21, 2
      %s28 = sadd.s32 %s21, 1
      %s29 = ssub.s32 %s21, %s28
      %p30 = scmp.eq.s32.totalorder %s29, 0
      %s32 = sadd.s32 %s31, 1
      %s33 = scalar_select %p30, %s31, %s32
      %p36 = pneg %p30
      %p37 = scmp.eq.s32.totalorder %s21, 1
      %p38 = por %p36, %p37
      %p39 = scmp.ne.s32.totalorder %s31, %s34
      %p40 = scmp.eq.s32.totalorder %s21, 0
      %p41 = por %p39, %p40
      %p42 = scmp.ne.s32.totalorder %s31, %s34
      %p43 = scmp.eq.s32.totalorder %s26, 1
      %p44 = por %p42, %p43
      %p45 = scmp.ne.s32.totalorder %s34, %s35
      %p46 = scmp.eq.s32.totalorder %s26, 0
      %p47 = por %p45, %p46
      %p48 = scmp.ne.s32.totalorder %s34, %s35
      %p49 = scmp.eq.s32.totalorder %s27, 1
      %p50 = por %p48, %p49
      %p52 = scmp.ne.s32.totalorder %s35, %s51
      %p53 = scmp.eq.s32.totalorder %s27, 0
      %p54 = por %p52, %p53
      %s56 = sadd.s32 %s55, 1
      %p59 = scmp.eq.s32.totalorder %s21, 1
      %p60 = scmp.ne.s32.totalorder %s55, %s57
      %p61 = scmp.eq.s32.totalorder %s21, 0
      %p62 = por %p60, %p61
      %p63 = scmp.ne.s32.totalorder %s55, %s57
      %p64 = scmp.eq.s32.totalorder %s26, 1
      %p65 = por %p63, %p64
      %p66 = scmp.ne.s32.totalorder %s57, %s58
      %p67 = scmp.eq.s32.totalorder %s26, 0
      %p68 = por %p66, %p67
      %p69 = scmp.ne.s32.totalorder %s57, %s58
      %p70 = scmp.eq.s32.totalorder %s27, 1
      %p71 = por %p69, %p70
      %p73 = scmp.ne.s32.totalorder %s58, %s72
      %p74 = scmp.eq.s32.totalorder %s27, 0
      %p75 = por %p73, %p74
      %s77 = sadd.s32 %s76, 1
      %p80 = scmp.eq.s32.totalorder %s21, 1
      %p81 = scmp.ne.s32.totalorder %s76, %s78
      %p82 = scmp.eq.s32.totalorder %s21, 0
      %p83 = por %p81, %p82
      %p84 = scmp.ne.s32.totalorder %s76, %s78
      %p85 = scmp.eq.s32.totalorder %s26, 1
      %p86 = por %p84, %p85
      %p87 = scmp.ne.s32.totalorder %s78, %s79
      %p88 = scmp.eq.s32.totalorder %s26, 0
      %p89 = por %p87, %p88
      %p90 = scmp.ne.s32.totalorder %s78, %s79
      %p91 = scmp.eq.s32.totalorder %s27, 1
      %p92 = por %p90, %p91
      %p94 = scmp.ne.s32.totalorder %s79, %s93
      %p95 = scmp.eq.s32.totalorder %s27, 0
      %p96 = por %p94, %p95
      %s98 = sadd.s32 %s97, 1
      %p101 = scmp.eq.s32.totalorder %s21, 1
      %p102 = scmp.ne.s32.totalorder %s97, %s99
      %p103 = scmp.eq.s32.totalorder %s21, 0
      %p104 = por %p102, %p103
      %p105 = scmp.ne.s32.totalorder %s97, %s99
      %p106 = scmp.eq.s32.totalorder %s26, 1
      %p107 = por %p105, %p106
      %p108 = scmp.ne.s32.totalorder %s99, %s100
      %p109 = scmp.eq.s32.totalorder %s26, 0
      %p110 = por %p108, %p109
      %p111 = scmp.ne.s32.totalorder %s99, %s100
      %p112 = scmp.eq.s32.totalorder %s27, 1
      %p113 = por %p111, %p112
      %p115 = scmp.ne.s32.totalorder %s100, %s114
      %p116 = scmp.eq.s32.totalorder %s27, 0
      %p117 = por %p115, %p116
      %s119 = sadd.s32 %s118, 1
      %p122 = scmp.eq.s32.totalorder %s21, 1
      %p123 = scmp.ne.s32.totalorder %s118, %s120
      %p124 = scmp.eq.s32.totalorder %s21, 0
      %p125 = por %p123, %p124
      %p126 = scmp.ne.s32.totalorder %s118, %s120
      %p127 = scmp.eq.s32.totalorder %s26, 1
      %p128 = por %p126, %p127
      %p129 = scmp.ne.s32.totalorder %s120, %s121
      %p130 = scmp.eq.s32.totalorder %s26, 0
      %p131 = por %p129, %p130
      %p132 = scmp.ne.s32.totalorder %s120, %s121
      %p133 = scmp.eq.s32.totalorder %s27, 1
      %p134 = por %p132, %p133
      %p136 = scmp.ne.s32.totalorder %s121, %s135
      %p137 = scmp.eq.s32.totalorder %s27, 0
      %p138 = por %p136, %p137
      %s140 = sadd.s32 %s139, 1
      %p143 = scmp.eq.s32.totalorder %s21, 1
      %p144 = scmp.ne.s32.totalorder %s139, %s141
      %p145 = scmp.eq.s32.totalorder %s21, 0
      %p146 = por %p144, %p145
      %p147 = scmp.ne.s32.totalorder %s139, %s141
      %p148 = scmp.eq.s32.totalorder %s26, 1
      %p149 = por %p147, %p148
      %p150 = scmp.ne.s32.totalorder %s141, %s142
      %p151 = scmp.eq.s32.totalorder %s26, 0
      %p152 = por %p150, %p151
      %p153 = scmp.ne.s32.totalorder %s141, %s142
      %p154 = scmp.eq.s32.totalorder %s27, 1
      %p155 = por %p153, %p154
      %p157 = scmp.ne.s32.totalorder %s142, %s156
      %p158 = scmp.eq.s32.totalorder %s27, 0
      %p159 = por %p157, %p158
      %s160 = ssub.s32 %s21, %s28
      %p161 = scmp.eq.s32.totalorder %s160, 0
      %s163 = sadd.s32 %s162, 1
      %s164 = scalar_select %p161, %s162, %s163
      %p167 = pneg %p161
      %p168 = scmp.eq.s32.totalorder %s21, 1
      %p169 = por %p167, %p168
      %p170 = scmp.ne.s32.totalorder %s162, %s165
      %p171 = scmp.eq.s32.totalorder %s21, 0
      %p172 = por %p170, %p171
      %p173 = scmp.ne.s32.totalorder %s162, %s165
      %p174 = scmp.eq.s32.totalorder %s26, 1
      %p175 = por %p173, %p174
      %p176 = scmp.ne.s32.totalorder %s165, %s166
      %p177 = scmp.eq.s32.totalorder %s26, 0
      %p178 = por %p176, %p177
      %p179 = scmp.ne.s32.totalorder %s165, %s166
      %p180 = scmp.eq.s32.totalorder %s27, 1
      %p181 = por %p179, %p180
      %p183 = scmp.ne.s32.totalorder %s166, %s182
      %p184 = scmp.eq.s32.totalorder %s27, 0
      %p185 = por %p183, %p184
      %p186 = scmp.le.s32.totalorder 1, %s21
      %p187 = scmp.lt.s32.totalorder %s21, 3
      %p188 = pnand %p186, %p187
      %p189 = pneg %p188
      // Predicated region
      $region9: #{resblock_forward.1} parent=5 // pred_check
        _
      $region10: #{resblock_forward.1} parent=5 // pred_check_branch
        %191 = sbr.rel (%p188) target = $region12
      $region11: #{resblock_forward.1} parent=5 // pred_region
        %s192 = ssub.s32 %s21, 1
        // Predicated region
        $region13: #{resblock_forward.1} parent=11 // pred_check
          %p193 = pneg %p68
        $region14: #{resblock_forward.1} parent=11 // pred_check_branch
          %195 = sbr.rel (%p193) target = $region16
        $region15: #{resblock_forward.1} parent=11 // pred_region
          %s197 = ssub.s32 64, 64
          %198 = vsyncadd [#allocation7], %s197
          %s200 = sshll.u32 [#allocation6], 4
          %s201 = int_to_ptr.vmem [resolvable:$true] %s200
          %203 = dma.hbm_to_vmem [thread:$0]  %s1, 64, %s201, [#allocation7]
        $region16: #{resblock_forward.1} parent=11 // pred_fallthru
          _
        // Predicated region
        $region17: #{resblock_forward.1} parent=11 // pred_check
          %p204 = pneg %p89
        $region18: #{resblock_forward.1} parent=11 // pred_check_branch
          %206 = sbr.rel (%p204) target = $region20
        $region19: #{resblock_forward.1} parent=11 // pred_region
          %s208 = ssub.s32 128, 128
          %209 = vsyncadd [#allocation7], %s208
          %s211 = sshll.u32 [#allocation8], 4
          %s212 = int_to_ptr.vmem [resolvable:$true] %s211
          %214 = dma.hbm_to_vmem [thread:$0]  %s2, 128, %s212, [#allocation7]
        $region20: #{resblock_forward.1} parent=11 // pred_fallthru
          _
        // Predicated region
        $region21: #{resblock_forward.1} parent=11 // pred_check
          %p215 = pneg %p110
        $region22: #{resblock_forward.1} parent=11 // pred_check_branch
          %217 = sbr.rel (%p215) target = $region24
        $region23: #{resblock_forward.1} parent=11 // pred_region
          %s219 = ssub.s32 64, 64
          %220 = vsyncadd [#allocation10], %s219
          %s222 = sshll.u32 [#allocation9], 4
          %s223 = int_to_ptr.vmem [resolvable:$true] %s222
          %225 = dma.hbm_to_vmem [thread:$0]  %s3, 64, %s223, [#allocation10]
        $region24: #{resblock_forward.1} parent=11 // pred_fallthru
          _
        // Predicated region
        $region25: #{resblock_forward.1} parent=11 // pred_check
          %p226 = pneg %p131
        $region26: #{resblock_forward.1} parent=11 // pred_check_branch
          %228 = sbr.rel (%p226) target = $region28
        $region27: #{resblock_forward.1} parent=11 // pred_region
          %s230 = ssub.s32 128, 128
          %231 = vsyncadd [#allocation10], %s230
          %s233 = sshll.u32 [#allocation11], 4
          %s234 = int_to_ptr.vmem [resolvable:$true] %s233
          %236 = dma.hbm_to_vmem [thread:$0]  %s4, 128, %s234, [#allocation10]
        $region28: #{resblock_forward.1} parent=11 // pred_fallthru
          _
        // Predicated region
        $region29: #{resblock_forward.1} parent=11 // pred_check
          %p237 = pneg %p152
        $region30: #{resblock_forward.1} parent=11 // pred_check_branch
          %239 = sbr.rel (%p237) target = $region32
        $region31: #{resblock_forward.1} parent=11 // pred_region
          %s241 = ssub.s32 96, 96
          %242 = vsyncadd [#allocation13], %s241
          %s244 = sshll.u32 [#allocation12], 4
          %s245 = int_to_ptr.vmem [resolvable:$true] %s244
          %247 = dma.hbm_to_vmem [thread:$0]  %s5, 96, %s245, [#allocation13]
        $region32: #{resblock_forward.1} parent=11 // pred_fallthru
          _
      $region12: #{resblock_forward.1} parent=5 // pred_fallthru
        _
      %p248 = scmp.lt.s32.totalorder %s21, 2
      // Predicated region
      $region33: #{resblock_forward.1} parent=5 // pred_check
        %p249 = pneg %p248
      $region34: #{resblock_forward.1} parent=5 // pred_check_branch
        %251 = sbr.rel (%p249) target = $region36
      $region35: #{resblock_forward.1} parent=5 // pred_region
        // Predicated region
        $region37: #{resblock_forward.1} parent=35 // pred_check
          %p252 = pneg %p41
        $region38: #{resblock_forward.1} parent=35 // pred_check_branch
          %254 = sbr.rel (%p252) target = $region40
        $region39: #{resblock_forward.1} parent=35 // pred_region
          %s255 = sand.u32 %s31, 1
          %s256 = scalar_lea.sflag [#allocation4], %s255
          %s257 = sand.u32 %s31, 1
          %s258 = smul.addr %s257, 64
          %s259 = scalar_lea.vmem [#allocation3], %s258
          %s260 = smul.u32 2, %s21
          %s262 = ssub.s32 1024, 1024
          %263 = vsyncadd %s256, %s262
          %s264 = smul.addr %s260, 4
          %s265 = smul.addr %s264, 128
          %s266 = scalar_lea.hbm %s0, %s265
          %s267 = sshll.u32 %s259, 4
          %s268 = int_to_ptr.vmem [resolvable:$true] %s267
          %273 = dma.hbm_to_vmem [thread:$0]  %s266, 1024, %s268, %s256, 512, 512, 32
        $region40: #{resblock_forward.1} parent=35 // pred_fallthru
          _
      $region36: #{resblock_forward.1} parent=5 // pred_fallthru
        _
      %p274 = scmp.le.s32.totalorder 1, %s21
      %p275 = scmp.lt.s32.totalorder %s21, 3
      %p276 = pnand %p274, %p275
      %p277 = pneg %p276
      // Predicated region
      $region41: #{resblock_forward.1} parent=5 // pred_check
        _
      $region42: #{resblock_forward.1} parent=5 // pred_check_branch
        %279 = sbr.rel (%p276) target = $region44
      $region43: #{resblock_forward.1} parent=5 // pred_region
        %s280 = ssub.s32 %s21, 1
        %s281 = sand.u32 %s34, 1
        %s282 = scalar_lea.sflag [#allocation4], %s281
        %s283 = sand.u32 %s34, 1
        %s284 = smul.addr %s283, 64
        %s285 = scalar_lea.vmem [#allocation3], %s284
        // Predicated region
        $region45: #{resblock_forward.1} parent=43 // pred_check
          %p286 = pneg %p47
        $region46: #{resblock_forward.1} parent=43 // pred_check_branch
          %288 = sbr.rel (%p286) target = $region48
        $region47: #{resblock_forward.1} parent=43 // pred_region
          %289 = dma.done %s282, 1024
        $region48: #{resblock_forward.1} parent=43 // pred_fallthru
          _
        // Predicated region
        $region49: #{resblock_forward.1} parent=43 // pred_check
          %p290 = pneg %p68
        $region50: #{resblock_forward.1} parent=43 // pred_check_branch
          %292 = sbr.rel (%p290) target = $region52
        $region51: #{resblock_forward.1} parent=43 // pred_region
          %293 = dma.done [#allocation7], 64
        $region52: #{resblock_forward.1} parent=43 // pred_fallthru
          _
        // Predicated region
        $region53: #{resblock_forward.1} parent=43 // pred_check
          %p294 = pneg %p89
        $region54: #{resblock_forward.1} parent=43 // pred_check_branch
          %296 = sbr.rel (%p294) target = $region56
        $region55: #{resblock_forward.1} parent=43 // pred_region
          %297 = dma.done [#allocation7], 128
        $region56: #{resblock_forward.1} parent=43 // pred_fallthru
          _
        // Predicated region
        $region57: #{resblock_forward.1} parent=43 // pred_check
          %p298 = pneg %p110
        $region58: #{resblock_forward.1} parent=43 // pred_check_branch
          %300 = sbr.rel (%p298) target = $region60
        $region59: #{resblock_forward.1} parent=43 // pred_region
          %301 = dma.done [#allocation10], 64
        $region60: #{resblock_forward.1} parent=43 // pred_fallthru
          _
        // Predicated region
        $region61: #{resblock_forward.1} parent=43 // pred_check
          %p302 = pneg %p131
        $region62: #{resblock_forward.1} parent=43 // pred_check_branch
          %304 = sbr.rel (%p302) target = $region64
        $region63: #{resblock_forward.1} parent=43 // pred_region
          %305 = dma.done [#allocation10], 128
        $region64: #{resblock_forward.1} parent=43 // pred_fallthru
          _
        // Predicated region
        $region65: #{resblock_forward.1} parent=43 // pred_check
          %p306 = pneg %p152
        $region66: #{resblock_forward.1} parent=43 // pred_check_branch
          %308 = sbr.rel (%p306) target = $region68
        $region67: #{resblock_forward.1} parent=43 // pred_region
          %309 = dma.done [#allocation13], 96
        $region68: #{resblock_forward.1} parent=43 // pred_fallthru
          _
        %s310 = sand.u32 %s34, 1
        %s311 = scalar_lea.sflag [#allocation4], %s310
        %s312 = sand.u32 %s34, 1
        %s313 = smul.addr %s312, 64
        %s314 = scalar_lea.vmem [#allocation3], %s313
        %p315 = pneg %p47
        %p316 = pneg %p44
        %p317 = pneg %p68
        %p318 = pneg %p65
        %p319 = pneg %p89
        %p320 = pneg %p86
        %p321 = pneg %p110
        %p322 = pneg %p107
        %p323 = pneg %p131
        %p324 = pneg %p128
        %p325 = pneg %p152
        %p326 = pneg %p149
        %p327 = pneg %p178
        %p328 = pneg %p175
        %s329 = sand.u32 %s165, 1
        %s330 = scalar_lea.sflag [#allocation5], %s329
        %s331 = sand.u32 %s165, 1
        %s332 = smul.addr %s331, 48
        %s333 = scalar_lea.vmem [#allocation14], %s332
        %s334 = smul.u32 2, %s26
        %s335 = smul.u32 2, %s26
        %v337 = vld [vmem:[%s285] sm:$0xff]
        %v338 = vld [vmem:[%s285 + $0x8] sm:$0xff]
        %v339 = vld [vmem:[%s285 + $0x10] sm:$0xff]
        %v340 = vld [vmem:[%s285 + $0x18] sm:$0xff]
        %v341 = vpack.c.bf16 %v337, %v337
        %v342 = vpack.c.bf16 %v338, %v338
        %v343 = vpack.c.bf16 %v339, %v339
        %v344 = vpack.c.bf16 %v340, %v340
        %v349 = vrot.slane %v341, 4
        %v350 = vrot.slane %v342, 4
        %v351 = vrot.slane %v343, 4
        %v352 = vrot.slane %v344, 4
        %353 = vrot.lane.b32.xlu0 %v349, 127
        %v354 = vpop.permute.xlu0 %353
        %355 = vrot.lane.b32.xlu0 %v350, 127
        %v356 = vpop.permute.xlu0 %355
        %357 = vrot.lane.b32.xlu0 %v351, 127
        %v358 = vpop.permute.xlu0 %357
        %359 = vrot.lane.b32.xlu0 %v352, 127
        %v360 = vpop.permute.xlu0 %359
        %vm361 = vcmask 1039360
        %v362 = vsel %vm361, %v354, %v356
        %v363 = vsel %vm361, %v356, %v358
        %v364 = vsel %vm361, %v358, %v360
        %365 = vrot.lane.b32.xlu0 %v341, 126
        %v366 = vpop.permute.xlu0 %365
        %367 = vrot.lane.b32.xlu0 %v342, 126
        %v368 = vpop.permute.xlu0 %367
        %369 = vrot.lane.b32.xlu0 %v343, 126
        %v370 = vpop.permute.xlu0 %369
        %371 = vrot.lane.b32.xlu0 %v344, 126
        %v372 = vpop.permute.xlu0 %371
        %vm373 = vcmask 1031168
        %v374 = vsel %vm373, %v366, %v368
        %v375 = vsel %vm373, %v368, %v370
        %v376 = vsel %vm373, %v370, %v372
        %377 = vrot.lane.b32.xlu0 %v349, 110
        %v378 = vpop.permute.xlu0 %377
        %379 = vrot.lane.b32.xlu0 %v350, 110
        %v380 = vpop.permute.xlu0 %379
        %381 = vrot.lane.b32.xlu0 %v351, 110
        %v382 = vpop.permute.xlu0 %381
        %383 = vrot.lane.b32.xlu0 %v352, 110
        %v384 = vpop.permute.xlu0 %383
        %vm385 = vcmask 900096
        %v386 = vsel %vm385, %v378, %v380
        %v387 = vsel %vm385, %v380, %v382
        %v388 = vsel %vm385, %v382, %v384
        %389 = vrot.lane.b32.xlu0 %v341, 109
        %v390 = vpop.permute.xlu0 %389
        %391 = vrot.lane.b32.xlu0 %v342, 109
        %v392 = vpop.permute.xlu0 %391
        %393 = vrot.lane.b32.xlu0 %v343, 109
        %v394 = vpop.permute.xlu0 %393
        %395 = vrot.lane.b32.xlu0 %v344, 109
        %v396 = vpop.permute.xlu0 %395
        %vm397 = vcmask 891904
        %v398 = vsel %vm397, %v390, %v392
        %v399 = vsel %vm397, %v392, %v394
        %v400 = vsel %vm397, %v394, %v396
        %401 = vrot.lane.b32.xlu0 %v349, 108
        %v402 = vpop.permute.xlu0 %401
        %403 = vrot.lane.b32.xlu0 %v350, 108
        %v404 = vpop.permute.xlu0 %403
        %405 = vrot.lane.b32.xlu0 %v351, 108
        %v406 = vpop.permute.xlu0 %405
        %407 = vrot.lane.b32.xlu0 %v352, 108
        %v408 = vpop.permute.xlu0 %407
        %vm409 = vcmask 883712
        %v410 = vsel %vm409, %v402, %v404
        %v411 = vsel %vm409, %v404, %v406
        %v412 = vsel %vm409, %v406, %v408
        %413 = vrot.lane.b32.xlu0 %v341, 92
        %v414 = vpop.permute.xlu0 %413
        %415 = vrot.lane.b32.xlu0 %v342, 92
        %v416 = vpop.permute.xlu0 %415
        %417 = vrot.lane.b32.xlu0 %v343, 92
        %v418 = vpop.permute.xlu0 %417
        %419 = vrot.lane.b32.xlu0 %v344, 92
        %v420 = vpop.permute.xlu0 %419
        %vm421 = vcmask 752640
        %v422 = vsel %vm421, %v414, %v416
        %v423 = vsel %vm421, %v416, %v418
        %v424 = vsel %vm421, %v418, %v420
        %425 = vrot.lane.b32.xlu0 %v349, 91
        %v426 = vpop.permute.xlu0 %425
        %427 = vrot.lane.b32.xlu0 %v350, 91
        %v428 = vpop.permute.xlu0 %427
        %429 = vrot.lane.b32.xlu0 %v351, 91
        %v430 = vpop.permute.xlu0 %429
        %431 = vrot.lane.b32.xlu0 %v352, 91
        %v432 = vpop.permute.xlu0 %431
        %vm433 = vcmask 744448
        %v434 = vsel %vm433, %v426, %v428
        %v435 = vsel %vm433, %v428, %v430
        %v436 = vsel %vm433, %v430, %v432
        %437 = vrot.lane.b32.xlu0 %v341, 90
        %v438 = vpop.permute.xlu0 %437
        %439 = vrot.lane.b32.xlu0 %v342, 90
        %v440 = vpop.permute.xlu0 %439
        %441 = vrot.lane.b32.xlu0 %v343, 90
        %v442 = vpop.permute.xlu0 %441
        %443 = vrot.lane.b32.xlu0 %v344, 90
        %v444 = vpop.permute.xlu0 %443
        %vm445 = vcmask 736256
        %v446 = vsel %vm445, %v438, %v440
        %v447 = vsel %vm445, %v440, %v442
        %v448 = vsel %vm445, %v442, %v444
        %vm449 = vcmask 1043456
        %v452 = vsel %vm449, %v341, %v362
        %v456 = vsel %vm449, %v342, %v363
        %v460 = vsel %vm449, %v343, %v364
        %v464 = vsel %vm449, %v374, %v386
        %v468 = vsel %vm449, %v375, %v387
        %v472 = vsel %vm449, %v376, %v388
        %v476 = vsel %vm449, %v398, %v410
        %v480 = vsel %vm449, %v399, %v411
        %v484 = vsel %vm449, %v400, %v412
        %v488 = vsel %vm449, %v422, %v434
        %v492 = vsel %vm449, %v423, %v435
        %v496 = vsel %vm449, %v424, %v436
        %s498 = scalar_lea.vmem %s285, 32 [#allocation3]
        %v499 = vld [vmem:[%s498] sm:$0xff]
        %v500 = vld [vmem:[%s498 + $0x8] sm:$0xff]
        %v501 = vld [vmem:[%s498 + $0x10] sm:$0xff]
        %v502 = vld [vmem:[%s498 + $0x18] sm:$0xff]
        %v503 = vpack.c.bf16 %v499, %v499
        %v504 = vpack.c.bf16 %v500, %v500
        %v505 = vpack.c.bf16 %v501, %v501
        %v506 = vpack.c.bf16 %v502, %v502
        %v511 = vrot.slane %v503, 4
        %v512 = vrot.slane %v504, 4
        %v513 = vrot.slane %v505, 4
        %v514 = vrot.slane %v506, 4
        %515 = vrot.lane.b32.xlu0 %v511, 127
        %v516 = vpop.permute.xlu0 %515
        %517 = vrot.lane.b32.xlu0 %v512, 127
        %v518 = vpop.permute.xlu0 %517
        %519 = vrot.lane.b32.xlu0 %v513, 127
        %v520 = vpop.permute.xlu0 %519
        %521 = vrot.lane.b32.xlu0 %v514, 127
        %v522 = vpop.permute.xlu0 %521
        %v523 = vsel %vm361, %v516, %v518
        %v524 = vsel %vm361, %v518, %v520
        %v525 = vsel %vm361, %v520, %v522
        %526 = vrot.lane.b32.xlu0 %v503, 126
        %v527 = vpop.permute.xlu0 %526
        %528 = vrot.lane.b32.xlu0 %v504, 126
        %v529 = vpop.permute.xlu0 %528
        %530 = vrot.lane.b32.xlu0 %v505, 126
        %v531 = vpop.permute.xlu0 %530
        %532 = vrot.lane.b32.xlu0 %v506, 126
        %v533 = vpop.permute.xlu0 %532
        %v534 = vsel %vm373, %v527, %v529
        %v535 = vsel %vm373, %v529, %v531
        %v536 = vsel %vm373, %v531, %v533
        %537 = vrot.lane.b32.xlu0 %v511, 110
        %v538 = vpop.permute.xlu0 %537
        %539 = vrot.lane.b32.xlu0 %v512, 110
        %v540 = vpop.permute.xlu0 %539
        %541 = vrot.lane.b32.xlu0 %v513, 110
        %v542 = vpop.permute.xlu0 %541
        %543 = vrot.lane.b32.xlu0 %v514, 110
        %v544 = vpop.permute.xlu0 %543
        %v545 = vsel %vm385, %v538, %v540
        %v546 = vsel %vm385, %v540, %v542
        %v547 = vsel %vm385, %v542, %v544
        %548 = vrot.lane.b32.xlu0 %v503, 109
        %v549 = vpop.permute.xlu0 %548
        %550 = vrot.lane.b32.xlu0 %v504, 109
        %v551 = vpop.permute.xlu0 %550
        %552 = vrot.lane.b32.xlu0 %v505, 109
        %v553 = vpop.permute.xlu0 %552
        %554 = vrot.lane.b32.xlu0 %v506, 109
        %v555 = vpop.permute.xlu0 %554
        %v556 = vsel %vm397, %v549, %v551
        %v557 = vsel %vm397, %v551, %v553
        %v558 = vsel %vm397, %v553, %v555
        %559 = vrot.lane.b32.xlu0 %v511, 108
        %v560 = vpop.permute.xlu0 %559
        %561 = vrot.lane.b32.xlu0 %v512, 108
        %v562 = vpop.permute.xlu0 %561
        %563 = vrot.lane.b32.xlu0 %v513, 108
        %v564 = vpop.permute.xlu0 %563
        %565 = vrot.lane.b32.xlu0 %v514, 108
        %v566 = vpop.permute.xlu0 %565
        %v567 = vsel %vm409, %v560, %v562
        %v568 = vsel %vm409, %v562, %v564
        %v569 = vsel %vm409, %v564, %v566
        %570 = vrot.lane.b32.xlu0 %v503, 92
        %v571 = vpop.permute.xlu0 %570
        %572 = vrot.lane.b32.xlu0 %v504, 92
        %v573 = vpop.permute.xlu0 %572
        %574 = vrot.lane.b32.xlu0 %v505, 92
        %v575 = vpop.permute.xlu0 %574
        %576 = vrot.lane.b32.xlu0 %v506, 92
        %v577 = vpop.permute.xlu0 %576
        %v578 = vsel %vm421, %v571, %v573
        %v579 = vsel %vm421, %v573, %v575
        %v580 = vsel %vm421, %v575, %v577
        %581 = vrot.lane.b32.xlu0 %v511, 91
        %v582 = vpop.permute.xlu0 %581
        %583 = vrot.lane.b32.xlu0 %v512, 91
        %v584 = vpop.permute.xlu0 %583
        %585 = vrot.lane.b32.xlu0 %v513, 91
        %v586 = vpop.permute.xlu0 %585
        %587 = vrot.lane.b32.xlu0 %v514, 91
        %v588 = vpop.permute.xlu0 %587
        %v589 = vsel %vm433, %v582, %v584
        %v590 = vsel %vm433, %v584, %v586
        %v591 = vsel %vm433, %v586, %v588
        %592 = vrot.lane.b32.xlu0 %v503, 90
        %v593 = vpop.permute.xlu0 %592
        %594 = vrot.lane.b32.xlu0 %v504, 90
        %v595 = vpop.permute.xlu0 %594
        %596 = vrot.lane.b32.xlu0 %v505, 90
        %v597 = vpop.permute.xlu0 %596
        %598 = vrot.lane.b32.xlu0 %v506, 90
        %v599 = vpop.permute.xlu0 %598
        %v600 = vsel %vm445, %v593, %v595
        %v601 = vsel %vm445, %v595, %v597
        %v602 = vsel %vm445, %v597, %v599
        %v605 = vsel %vm449, %v503, %v523
        %v609 = vsel %vm449, %v504, %v524
        %v613 = vsel %vm449, %v505, %v525
        %v617 = vsel %vm449, %v534, %v545
        %v621 = vsel %vm449, %v535, %v546
        %v625 = vsel %vm449, %v536, %v547
        %v629 = vsel %vm449, %v556, %v567
        %v633 = vsel %vm449, %v557, %v568
        %v637 = vsel %vm449, %v558, %v569
        %v641 = vsel %vm449, %v578, %v589
        %v645 = vsel %vm449, %v579, %v590
        %v649 = vsel %vm449, %v580, %v591
        %v651 = vld [vmem:[#allocation6] sm:$0xf]
        %v652 = vld [vmem:[#allocation8] sm:$0xff]
        %654 = vset.pattern.permute.xlu0 0
        %655 = vperm.xlu0 %654, %v652
        %v656 = vpop.permute.xlu0 %655
        %vm658 = vcmask 588800
        %v660 = vsel %vm658, %v651, 0
        %v663 = vsel %vm449, %v446, 0
        %v666 = vsel %vm449, %v447, 0
        %v669 = vsel %vm449, %v448, 0
        %v672 = vsel %vm449, %v600, 0
        %v675 = vsel %vm449, %v601, 0
        %v678 = vsel %vm449, %v602, 0
        %680 = vmatprep.subr.bf16.mxu0 %v456
        %681 = vmatpush1.bf16.msra.mxu0 %v452
        %682 = vmatprep.subr.bf16.mxu0 %v468
        %683 = vmatpush1.bf16.msra.mxu0 %v464
        %684 = vmatprep.subr.bf16.mxu0 %v480
        %685 = vmatpush1.bf16.msra.mxu0 %v476
        %686 = vmatprep.subr.bf16.mxu0 %v492
        %687 = vmatpush1.bf16.msra.mxu0 %v488
        %688 = vmatprep.subr.bf16.mxu0 %v666
        %689 = vmatpush1.bf16.msra.mxu0 %v663
        %690 = vmatprep.subr.bf16.mxu0 0
        %691 = vmatpush1.bf16.msra.mxu0 0
        %692 = vmatprep.subr.bf16.mxu0 0
        %693 = vmatpush1.bf16.msra.mxu0 0
        %694 = vmatprep.subr.bf16.mxu0 0
        %695 = vmatpush1.bf16.msra.mxu0 0
        %696 = vmatprep.subr.bf16.mxu0 0
        %697 = vmatpush1.bf16.msra.mxu0 0
        %698 = vmatprep.subr.bf16.mxu0 0
        %699 = vmatpush1.bf16.msra.mxu0 0
        %700 = vmatprep.subr.bf16.mxu0 0
        %701 = vmatpush1.bf16.msra.mxu0 0
        %702 = vmatprep.subr.bf16.mxu0 0
        %703 = vmatpush1.bf16.msra.mxu0 0
        %704 = vmatprep.subr.bf16.mxu0 0
        %705 = vmatpush1.bf16.msra.mxu0 0
        %706 = vmatprep.subr.bf16.mxu0 0
        %707 = vmatpush1.bf16.msra.mxu0 0
        %708 = vmatprep.subr.bf16.mxu0 0
        %709 = vmatpush1.bf16.msra.mxu0 0
        %710 = vmatprep.subr.bf16.mxu0 0
        %711 = vmatpush1.bf16.msra.mxu0 0
        %712 = vmatprep.mubr.bf16.mxu0 0
        %713 = vmatmul.mubr.bf16.gmra.mrb[0].mxu0 %v660
        %v714 = vpop.f32.mrb[0].mxu0
        %v715 = vadd.f32 %v656, %v714
        %v716 = vpop.f32.mrb[0].mxu0
        %v717 = vadd.f32 %v656, %v716
        %v718 = vpop.f32.mrb[0].mxu0
        %v719 = vpop.f32.mrb[0].mxu0
        %720 = vdwg.mxu0
        %721 = vmatprep.subr.bf16.mxu0 %v605
        %722 = vmatpush1.bf16.msra.mxu0 %v460
        %723 = vmatprep.subr.bf16.mxu0 %v617
        %724 = vmatpush1.bf16.msra.mxu0 %v472
        %725 = vmatprep.subr.bf16.mxu0 %v629
        %726 = vmatpush1.bf16.msra.mxu0 %v484
        %727 = vmatprep.subr.bf16.mxu0 %v641
        %728 = vmatpush1.bf16.msra.mxu0 %v496
        %729 = vmatprep.subr.bf16.mxu0 %v672
        %730 = vmatpush1.bf16.msra.mxu0 %v669
        %731 = vmatprep.subr.bf16.mxu0 0
        %732 = vmatpush1.bf16.msra.mxu0 0
        %733 = vmatprep.subr.bf16.mxu0 0
        %734 = vmatpush1.bf16.msra.mxu0 0
        %735 = vmatprep.subr.bf16.mxu0 0
        %736 = vmatpush1.bf16.msra.mxu0 0
        %737 = vmatprep.subr.bf16.mxu0 0
        %738 = vmatpush1.bf16.msra.mxu0 0
        %739 = vmatprep.subr.bf16.mxu0 0
        %740 = vmatpush1.bf16.msra.mxu0 0
        %741 = vmatprep.subr.bf16.mxu0 0
        %742 = vmatpush1.bf16.msra.mxu0 0
        %743 = vmatprep.subr.bf16.mxu0 0
        %744 = vmatpush1.bf16.msra.mxu0 0
        %745 = vmatprep.subr.bf16.mxu0 0
        %746 = vmatpush1.bf16.msra.mxu0 0
        %747 = vmatprep.subr.bf16.mxu0 0
        %748 = vmatpush1.bf16.msra.mxu0 0
        %749 = vmatprep.subr.bf16.mxu0 0
        %750 = vmatpush1.bf16.msra.mxu0 0
        %751 = vmatprep.subr.bf16.mxu0 0
        %752 = vmatpush1.bf16.msra.mxu0 0
        %753 = vmatprep.mubr.bf16.mxu0 0
        %754 = vmatmul.mubr.bf16.gmra.mrb[0].mxu0 %v660
        %v755 = vpop.f32.mrb[0].mxu0
        %v756 = vadd.f32 %v656, %v755
        %v757 = vpop.f32.mrb[0].mxu0
        %v758 = vadd.f32 %v656, %v757
        %v759 = vpop.f32.mrb[0].mxu0
        %v760 = vpop.f32.mrb[0].mxu0
        %761 = vdwg.mxu0
        %762 = vmatprep.subr.bf16.mxu0 %v613
        %763 = vmatpush1.bf16.msra.mxu0 %v609
        %764 = vmatprep.subr.bf16.mxu0 %v625
        %765 = vmatpush1.bf16.msra.mxu0 %v621
        %766 = vmatprep.subr.bf16.mxu0 %v637
        %767 = vmatpush1.bf16.msra.mxu0 %v633
        %768 = vmatprep.subr.bf16.mxu0 %v649
        %769 = vmatpush1.bf16.msra.mxu0 %v645
        %770 = vmatprep.subr.bf16.mxu0 %v678
        %771 = vmatpush1.bf16.msra.mxu0 %v675
        %772 = vmatprep.subr.bf16.mxu0 0
        %773 = vmatpush1.bf16.msra.mxu0 0
        %774 = vmatprep.subr.bf16.mxu0 0
        %775 = vmatpush1.bf16.msra.mxu0 0
        %776 = vmatprep.subr.bf16.mxu0 0
        %777 = vmatpush1.bf16.msra.mxu0 0
        %778 = vmatprep.subr.bf16.mxu0 0
        %779 = vmatpush1.bf16.msra.mxu0 0
        %780 = vmatprep.subr.bf16.mxu0 0
        %781 = vmatpush1.bf16.msra.mxu0 0
        %782 = vmatprep.subr.bf16.mxu0 0
        %783 = vmatpush1.bf16.msra.mxu0 0
        %784 = vmatprep.subr.bf16.mxu0 0
        %785 = vmatpush1.bf16.msra.mxu0 0
        %786 = vmatprep.subr.bf16.mxu0 0
        %787 = vmatpush1.bf16.msra.mxu0 0
        %788 = vmatprep.subr.bf16.mxu0 0
        %789 = vmatpush1.bf16.msra.mxu0 0
        %790 = vmatprep.subr.bf16.mxu0 0
        %791 = vmatpush1.bf16.msra.mxu0 0
        %792 = vmatprep.subr.bf16.mxu0 0
        %793 = vmatpush1.bf16.msra.mxu0 0
        %794 = vmatprep.mubr.bf16.mxu0 0
        %795 = vmatmul.mubr.bf16.gmra.mrb[0].mxu0 %v660
        %v796 = vpop.f32.mrb[0].mxu0
        %v797 = vadd.f32 %v656, %v796
        %v798 = vpop.f32.mrb[0].mxu0
        %v799 = vadd.f32 %v656, %v798
        %v800 = vpop.f32.mrb[0].mxu0
        %v801 = vpop.f32.mrb[0].mxu0
        %802 = vdwg.mxu0
        %v803 = vmax.f32 %v715, 0.0
        %v804 = vmax.f32 %v717, 0.0
        %v805 = vmax.f32 %v756, 0.0
        %v806 = vmax.f32 %v758, 0.0
        %v807 = vmax.f32 %v797, 0.0
        %v808 = vmax.f32 %v799, 0.0
        %v809 = vld [vmem:[#allocation12] sm:$0x3f]
        %v811 = vlaneseq
        %v812 = vshrl.u32 %v811, 7
        %v813 = vsub.s32 0, %v812
        %v814 = vrot.slane %v809, %v813
        %v815 = vlaneseq
        %v816 = vshrl.u32 %v815, 7
        %v817 = vsub.s32 1, %v816
        %v818 = vrot.slane %v809, %v817
        %v819 = vlaneseq
        %v820 = vshrl.u32 %v819, 7
        %v821 = vsub.s32 2, %v820
        %v822 = vrot.slane %v809, %v821
        %v823 = vlaneseq
        %v824 = vshrl.u32 %v823, 7
        %v825 = vsub.s32 3, %v824
        %v826 = vrot.slane %v809, %v825
        %v827 = vlaneseq
        %v828 = vshrl.u32 %v827, 7
        %v829 = vsub.s32 4, %v828
        %v830 = vrot.slane %v809, %v829
        %v831 = vlaneseq
        %v832 = vshrl.u32 %v831, 7
        %v833 = vsub.s32 5, %v832
        %v834 = vrot.slane %v809, %v833
        %v841 = vmul.f32 %v803, %v814
        %v842 = vmul.f32 %v804, %v818
        %v843 = vmul.f32 %v805, %v822
        %v844 = vmul.f32 %v806, %v826
        %v845 = vmul.f32 %v807, %v830
        %v846 = vmul.f32 %v808, %v834
        %v847 = vpack.c.bf16 %v841, %v841
        %v848 = vpack.c.bf16 %v842, %v842
        %v849 = vpack.c.bf16 %v843, %v843
        %v850 = vpack.c.bf16 %v844, %v844
        %v851 = vpack.c.bf16 %v845, %v845
        %v852 = vpack.c.bf16 %v846, %v846
        %853 = vst [vmem:[#allocation2] sm:$0xf] 0
        %854 = vst [vmem:[#allocation2 + $0x10] sm:$0xf] 0
        %v858 = vunpack.c.l.b16 %v847
        %v859 = vunpack.c.l.b16 %v848
        %v860 = vunpack.c.l.b16 %v849
        %v861 = vpack.c.b16 %v859, %v858
        %v862 = vpack.c.b16 %v860, %v860
        %865 = vst [vmem:[#allocation2 + $0x4] sm:$0xff] %v861
        %866 = vst [vmem:[#allocation2 + $0xc] sm:$0xf] %v862
        %867 = vst [vmem:[#allocation2 + $0x14] sm:$0xf] 0
        %868 = vst [vmem:[#allocation2 + $0x24] sm:$0xf] 0
        %v872 = vunpack.c.l.b16 %v850
        %v873 = vunpack.c.l.b16 %v851
        %v874 = vunpack.c.l.b16 %v852
        %v875 = vpack.c.b16 %v873, %v872
        %v876 = vpack.c.b16 %v874, %v874
        %879 = vst [vmem:[#allocation2 + $0x18] sm:$0xff] %v875
        %880 = vst [vmem:[#allocation2 + $0x20] sm:$0xf] %v876
        %v881 = vld [vmem:[#allocation2] sm:$0xff]
        %v882 = vld [vmem:[#allocation2 + $0x8] sm:$0xff]
        %v883 = vld [vmem:[#allocation2 + $0x4] sm:$0xff]
        %v884 = vld [vmem:[#allocation2 + $0xc] sm:$0xf]
        %v885 = vld [vmem:[#allocation2 + $0xc] sm:$0xff]
        %v888 = vunpack.c.l.b16 %v881
        %v889 = vunpack.c.h.b16 %v881
        %v890 = vunpack.c.l.b16 %v882
        %v891 = vunpack.c.h.b16 %v882
        %v892 = vpack.c.b16 %v888, %v888
        %v893 = vpack.c.b16 %v889, %v889
        %v894 = vpack.c.b16 %v890, %v890
        %v895 = vpack.c.b16 %v891, %v891
        %896 = vrot.lane.b32.xlu0 %v892, 127
        %v897 = vpop.permute.xlu0 %896
        %898 = vrot.lane.b32.xlu0 %v893, 127
        %v899 = vpop.permute.xlu0 %898
        %900 = vrot.lane.b32.xlu0 %v894, 127
        %v901 = vpop.permute.xlu0 %900
        %902 = vrot.lane.b32.xlu0 %v895, 127
        %v903 = vpop.permute.xlu0 %902
        %v904 = vsel %vm361, %v897, %v899
        %v905 = vsel %vm361, %v899, %v901
        %v906 = vsel %vm361, %v901, %v903
        %907 = vrot.lane.b32.xlu0 %v892, 126
        %v908 = vpop.permute.xlu0 %907
        %909 = vrot.lane.b32.xlu0 %v893, 126
        %v910 = vpop.permute.xlu0 %909
        %911 = vrot.lane.b32.xlu0 %v894, 126
        %v912 = vpop.permute.xlu0 %911
        %913 = vrot.lane.b32.xlu0 %v895, 126
        %v914 = vpop.permute.xlu0 %913
        %v915 = vsel %vm373, %v908, %v910
        %v916 = vsel %vm373, %v910, %v912
        %v917 = vsel %vm373, %v912, %v914
        %918 = vrot.lane.b32.xlu0 %v892, 110
        %v919 = vpop.permute.xlu0 %918
        %920 = vrot.lane.b32.xlu0 %v893, 110
        %v921 = vpop.permute.xlu0 %920
        %922 = vrot.lane.b32.xlu0 %v894, 110
        %v923 = vpop.permute.xlu0 %922
        %924 = vrot.lane.b32.xlu0 %v895, 110
        %v925 = vpop.permute.xlu0 %924
        %v926 = vsel %vm385, %v919, %v921
        %v927 = vsel %vm385, %v921, %v923
        %v928 = vsel %vm385, %v923, %v925
        %v931 = vunpack.c.l.b16 %v883
        %v932 = vunpack.c.h.b16 %v883
        %v933 = vunpack.c.l.b16 %v884
        %v934 = vpack.c.b16 %v931, %v931
        %v935 = vpack.c.b16 %v932, %v932
        %v936 = vpack.c.b16 %v933, %v933
        %937 = vrot.lane.b32.xlu0 %v934, 109
        %v938 = vpop.permute.xlu0 %937
        %939 = vrot.lane.b32.xlu0 %v935, 109
        %v940 = vpop.permute.xlu0 %939
        %941 = vrot.lane.b32.xlu0 %v936, 109
        %v942 = vpop.permute.xlu0 %941
        %v943 = vsel %vm397, %v938, %v940
        %v944 = vsel %vm397, %v940, %v942
        %v946 = vunpack.c.l.b16 %v885
        %v947 = vunpack.c.h.b16 %v885
        %v948 = vpack.c.b16 %v946, %v946
        %v949 = vpack.c.b16 %v947, %v947
        %950 = vrot.lane.b32.xlu0 %v934, 108
        %v951 = vpop.permute.xlu0 %950
        %952 = vrot.lane.b32.xlu0 %v935, 108
        %v953 = vpop.permute.xlu0 %952
        %954 = vrot.lane.b32.xlu0 %v948, 108
        %v955 = vpop.permute.xlu0 %954
        %956 = vrot.lane.b32.xlu0 %v949, 108
        %v957 = vpop.permute.xlu0 %956
        %v958 = vsel %vm409, %v951, %v953
        %v959 = vsel %vm409, %v953, %v955
        %v960 = vsel %vm409, %v955, %v957
        %961 = vrot.lane.b32.xlu0 %v934, 92
        %v962 = vpop.permute.xlu0 %961
        %963 = vrot.lane.b32.xlu0 %v935, 92
        %v964 = vpop.permute.xlu0 %963
        %965 = vrot.lane.b32.xlu0 %v948, 92
        %v966 = vpop.permute.xlu0 %965
        %967 = vrot.lane.b32.xlu0 %v949, 92
        %v968 = vpop.permute.xlu0 %967
        %v969 = vsel %vm421, %v962, %v964
        %v970 = vsel %vm421, %v964, %v966
        %v971 = vsel %vm421, %v966, %v968
        %972 = vrot.lane.b32.xlu0 %v934, 91
        %v973 = vpop.permute.xlu0 %972
        %974 = vrot.lane.b32.xlu0 %v935, 91
        %v975 = vpop.permute.xlu0 %974
        %976 = vrot.lane.b32.xlu0 %v948, 91
        %v977 = vpop.permute.xlu0 %976
        %978 = vrot.lane.b32.xlu0 %v949, 91
        %v979 = vpop.permute.xlu0 %978
        %v980 = vsel %vm433, %v973, %v975
        %v981 = vsel %vm433, %v975, %v977
        %v982 = vsel %vm433, %v977, %v979
        %983 = vrot.lane.b32.xlu0 %v934, 90
        %v984 = vpop.permute.xlu0 %983
        %985 = vrot.lane.b32.xlu0 %v935, 90
        %v986 = vpop.permute.xlu0 %985
        %987 = vrot.lane.b32.xlu0 %v948, 90
        %v988 = vpop.permute.xlu0 %987
        %989 = vrot.lane.b32.xlu0 %v949, 90
        %v990 = vpop.permute.xlu0 %989
        %v991 = vsel %vm445, %v984, %v986
        %v992 = vsel %vm445, %v986, %v988
        %v993 = vsel %vm445, %v988, %v990
        %v996 = vsel %vm449, %v892, %v904
        %v999 = vsel %vm449, %v893, %v905
        %v1002 = vsel %vm449, %v894, %v906
        %v1005 = vsel %vm449, %v895, %v903
        %v1008 = vsel %vm449, %v915, %v926
        %v1011 = vsel %vm449, %v916, %v927
        %v1014 = vsel %vm449, %v917, %v928
        %v1017 = vsel %vm449, %v914, %v925
        %v1020 = vsel %vm449, %v938, %v951
        %v1023 = vsel %vm449, %v943, %v958
        %v1026 = vsel %vm449, %v944, %v959
        %v1029 = vsel %vm449, %v942, %v960
        %v1032 = vsel %vm449, %v962, %v973
        %v1035 = vsel %vm449, %v969, %v980
        %v1038 = vsel %vm449, %v970, %v981
        %v1041 = vsel %vm449, %v971, %v982
        %v1042 = vld [vmem:[#allocation2 + $0x14] sm:$0xff]
        %v1043 = vld [vmem:[#allocation2 + $0x1c] sm:$0xff]
        %v1044 = vld [vmem:[#allocation2 + $0x18] sm:$0xff]
        %v1045 = vld [vmem:[#allocation2 + $0x20] sm:$0xf]
        %v1046 = vld [vmem:[#allocation2 + $0x18] sm:$0xff]
        %v1047 = vld [vmem:[#allocation2 + $0x20] sm:$0xff]
        %v1050 = vunpack.c.l.b16 %v1042
        %v1051 = vunpack.c.h.b16 %v1042
        %v1052 = vunpack.c.l.b16 %v1043
        %v1053 = vunpack.c.h.b16 %v1043
        %v1054 = vpack.c.b16 %v1050, %v1050
        %v1055 = vpack.c.b16 %v1051, %v1051
        %v1056 = vpack.c.b16 %v1052, %v1052
        %v1057 = vpack.c.b16 %v1053, %v1053
        %1058 = vrot.lane.b32.xlu0 %v1054, 127
        %v1059 = vpop.permute.xlu0 %1058
        %1060 = vrot.lane.b32.xlu0 %v1055, 127
        %v1061 = vpop.permute.xlu0 %1060
        %1062 = vrot.lane.b32.xlu0 %v1056, 127
        %v1063 = vpop.permute.xlu0 %1062
        %1064 = vrot.lane.b32.xlu0 %v1057, 127
        %v1065 = vpop.permute.xlu0 %1064
        %v1066 = vsel %vm361, %v1059, %v1061
        %v1067 = vsel %vm361, %v1061, %v1063
        %v1068 = vsel %vm361, %v1063, %v1065
        %1069 = vrot.lane.b32.xlu0 %v1054, 126
        %v1070 = vpop.permute.xlu0 %1069
        %1071 = vrot.lane.b32.xlu0 %v1055, 126
        %v1072 = vpop.permute.xlu0 %1071
        %1073 = vrot.lane.b32.xlu0 %v1056, 126
        %v1074 = vpop.permute.xlu0 %1073
        %1075 = vrot.lane.b32.xlu0 %v1057, 126
        %v1076 = vpop.permute.xlu0 %1075
        %v1077 = vsel %vm373, %v1070, %v1072
        %v1078 = vsel %vm373, %v1072, %v1074
        %v1079 = vsel %vm373, %v1074, %v1076
        %1080 = vrot.lane.b32.xlu0 %v1054, 110
        %v1081 = vpop.permute.xlu0 %1080
        %1082 = vrot.lane.b32.xlu0 %v1055, 110
        %v1083 = vpop.permute.xlu0 %1082
        %1084 = vrot.lane.b32.xlu0 %v1056, 110
        %v1085 = vpop.permute.xlu0 %1084
        %1086 = vrot.lane.b32.xlu0 %v1057, 110
        %v1087 = vpop.permute.xlu0 %1086
        %v1088 = vsel %vm385, %v1081, %v1083
        %v1089 = vsel %vm385, %v1083, %v1085
        %v1090 = vsel %vm385, %v1085, %v1087
        %v1093 = vunpack.c.l.b16 %v1044
        %v1094 = vunpack.c.h.b16 %v1044
        %v1095 = vunpack.c.l.b16 %v1045
        %v1096 = vpack.c.b16 %v1093, %v1093
        %v1097 = vpack.c.b16 %v1094, %v1094
        %v1098 = vpack.c.b16 %v1095, %v1095
        %1099 = vrot.lane.b32.xlu0 %v1096, 109
        %v1100 = vpop.permute.xlu0 %1099
        %1101 = vrot.lane.b32.xlu0 %v1097, 109
        %v1102 = vpop.permute.xlu0 %1101
        %1103 = vrot.lane.b32.xlu0 %v1098, 109
        %v1104 = vpop.permute.xlu0 %1103
        %v1105 = vsel %vm397, %v1100, %v1102
        %v1106 = vsel %vm397, %v1102, %v1104
        %v1109 = vunpack.c.l.b16 %v1046
        %v1110 = vunpack.c.h.b16 %v1046
        %v1111 = vunpack.c.l.b16 %v1047
        %v1112 = vunpack.c.h.b16 %v1047
        %v1113 = vpack.c.b16 %v1109, %v1109
        %v1114 = vpack.c.b16 %v1110, %v1110
        %v1115 = vpack.c.b16 %v1111, %v1111
        %v1116 = vpack.c.b16 %v1112, %v1112
        %1117 = vrot.lane.b32.xlu0 %v1113, 108
        %v1118 = vpop.permute.xlu0 %1117
        %1119 = vrot.lane.b32.xlu0 %v1114, 108
        %v1120 = vpop.permute.xlu0 %1119
        %1121 = vrot.lane.b32.xlu0 %v1115, 108
        %v1122 = vpop.permute.xlu0 %1121
        %1123 = vrot.lane.b32.xlu0 %v1116, 108
        %v1124 = vpop.permute.xlu0 %1123
        %v1125 = vsel %vm409, %v1118, %v1120
        %v1126 = vsel %vm409, %v1120, %v1122
        %v1127 = vsel %vm409, %v1122, %v1124
        %1128 = vrot.lane.b32.xlu0 %v1113, 92
        %v1129 = vpop.permute.xlu0 %1128
        %1130 = vrot.lane.b32.xlu0 %v1114, 92
        %v1131 = vpop.permute.xlu0 %1130
        %1132 = vrot.lane.b32.xlu0 %v1115, 92
        %v1133 = vpop.permute.xlu0 %1132
        %1134 = vrot.lane.b32.xlu0 %v1116, 92
        %v1135 = vpop.permute.xlu0 %1134
        %v1136 = vsel %vm421, %v1129, %v1131
        %v1137 = vsel %vm421, %v1131, %v1133
        %v1138 = vsel %vm421, %v1133, %v1135
        %1139 = vrot.lane.b32.xlu0 %v1113, 91
        %v1140 = vpop.permute.xlu0 %1139
        %1141 = vrot.lane.b32.xlu0 %v1114, 91
        %v1142 = vpop.permute.xlu0 %1141
        %1143 = vrot.lane.b32.xlu0 %v1115, 91
        %v1144 = vpop.permute.xlu0 %1143
        %1145 = vrot.lane.b32.xlu0 %v1116, 91
        %v1146 = vpop.permute.xlu0 %1145
        %v1147 = vsel %vm433, %v1140, %v1142
        %v1148 = vsel %vm433, %v1142, %v1144
        %v1149 = vsel %vm433, %v1144, %v1146
        %1150 = vrot.lane.b32.xlu0 %v1113, 90
        %v1151 = vpop.permute.xlu0 %1150
        %1152 = vrot.lane.b32.xlu0 %v1114, 90
        %v1153 = vpop.permute.xlu0 %1152
        %1154 = vrot.lane.b32.xlu0 %v1115, 90
        %v1155 = vpop.permute.xlu0 %1154
        %1156 = vrot.lane.b32.xlu0 %v1116, 90
        %v1157 = vpop.permute.xlu0 %1156
        %v1158 = vsel %vm445, %v1151, %v1153
        %v1159 = vsel %vm445, %v1153, %v1155
        %v1160 = vsel %vm445, %v1155, %v1157
        %v1163 = vsel %vm449, %v1054, %v1066
        %v1166 = vsel %vm449, %v1055, %v1067
        %v1169 = vsel %vm449, %v1056, %v1068
        %v1172 = vsel %vm449, %v1057, %v1065
        %v1175 = vsel %vm449, %v1077, %v1088
        %v1178 = vsel %vm449, %v1078, %v1089
        %v1181 = vsel %vm449, %v1079, %v1090
        %v1184 = vsel %vm449, %v1076, %v1087
        %v1187 = vsel %vm449, %v1100, %v1118
        %v1190 = vsel %vm449, %v1105, %v1125
        %v1193 = vsel %vm449, %v1106, %v1126
        %v1196 = vsel %vm449, %v1104, %v1127
        %v1199 = vsel %vm449, %v1129, %v1140
        %v1202 = vsel %vm449, %v1136, %v1147
        %v1205 = vsel %vm449, %v1137, %v1148
        %v1208 = vsel %vm449, %v1138, %v1149
        %1225 = vrot.lane.b32.xlu0 %v996, 19
        %v1226 = vpop.permute.xlu0 %1225
        %1227 = vrot.lane.b32.xlu0 %v999, 19
        %v1228 = vpop.permute.xlu0 %1227
        %1229 = vrot.lane.b32.xlu0 %v1002, 19
        %v1230 = vpop.permute.xlu0 %1229
        %1231 = vrot.lane.b32.xlu0 %v1005, 19
        %v1232 = vpop.permute.xlu0 %1231
        %1233 = vrot.lane.b32.xlu0 %v1008, 19
        %v1234 = vpop.permute.xlu0 %1233
        %1235 = vrot.lane.b32.xlu0 %v1011, 19
        %v1236 = vpop.permute.xlu0 %1235
        %1237 = vrot.lane.b32.xlu0 %v1014, 19
        %v1238 = vpop.permute.xlu0 %1237
        %1239 = vrot.lane.b32.xlu0 %v1017, 19
        %v1240 = vpop.permute.xlu0 %1239
        %1241 = vrot.lane.b32.xlu0 %v1020, 19
        %v1242 = vpop.permute.xlu0 %1241
        %1243 = vrot.lane.b32.xlu0 %v1023, 19
        %v1244 = vpop.permute.xlu0 %1243
        %1245 = vrot.lane.b32.xlu0 %v1026, 19
        %v1246 = vpop.permute.xlu0 %1245
        %1247 = vrot.lane.b32.xlu0 %v1029, 19
        %v1248 = vpop.permute.xlu0 %1247
        %1249 = vrot.lane.b32.xlu0 %v1032, 19
        %v1250 = vpop.permute.xlu0 %1249
        %1251 = vrot.lane.b32.xlu0 %v1035, 19
        %v1252 = vpop.permute.xlu0 %1251
        %1253 = vrot.lane.b32.xlu0 %v1038, 19
        %v1254 = vpop.permute.xlu0 %1253
        %1255 = vrot.lane.b32.xlu0 %v1041, 19
        %v1256 = vpop.permute.xlu0 %1255
        %1257 = vrot.lane.b32.xlu0 %v984, 19
        %v1258 = vpop.permute.xlu0 %1257
        %1259 = vrot.lane.b32.xlu0 %v991, 19
        %v1260 = vpop.permute.xlu0 %1259
        %1261 = vrot.lane.b32.xlu0 %v992, 19
        %v1262 = vpop.permute.xlu0 %1261
        %1263 = vrot.lane.b32.xlu0 %v993, 19
        %v1264 = vpop.permute.xlu0 %1263
        %vm1265 = vcmask 154624
        %v1266 = vsel %vm1265, %v1226, %v1228
        %v1267 = vsel %vm1265, %v1228, %v1230
        %v1268 = vsel %vm1265, %v1230, %v1232
        %v1269 = vsel %vm1265, %v1234, %v1236
        %v1270 = vsel %vm1265, %v1236, %v1238
        %v1271 = vsel %vm1265, %v1238, %v1240
        %v1272 = vsel %vm1265, %v1242, %v1244
        %v1273 = vsel %vm1265, %v1244, %v1246
        %v1274 = vsel %vm1265, %v1246, %v1248
        %v1275 = vsel %vm1265, %v1250, %v1252
        %v1276 = vsel %vm1265, %v1252, %v1254
        %v1277 = vsel %vm1265, %v1254, %v1256
        %v1278 = vsel %vm1265, %v1258, %v1260
        %v1279 = vsel %vm1265, %v1260, %v1262
        %v1280 = vsel %vm1265, %v1262, %v1264
        %1309 = vrot.lane.b32.xlu0 %v1163, 19
        %v1310 = vpop.permute.xlu0 %1309
        %1311 = vrot.lane.b32.xlu0 %v1166, 19
        %v1312 = vpop.permute.xlu0 %1311
        %1313 = vrot.lane.b32.xlu0 %v1169, 19
        %v1314 = vpop.permute.xlu0 %1313
        %1315 = vrot.lane.b32.xlu0 %v1172, 19
        %v1316 = vpop.permute.xlu0 %1315
        %1317 = vrot.lane.b32.xlu0 %v1175, 19
        %v1318 = vpop.permute.xlu0 %1317
        %1319 = vrot.lane.b32.xlu0 %v1178, 19
        %v1320 = vpop.permute.xlu0 %1319
        %1321 = vrot.lane.b32.xlu0 %v1181, 19
        %v1322 = vpop.permute.xlu0 %1321
        %1323 = vrot.lane.b32.xlu0 %v1184, 19
        %v1324 = vpop.permute.xlu0 %1323
        %1325 = vrot.lane.b32.xlu0 %v1187, 19
        %v1326 = vpop.permute.xlu0 %1325
        %1327 = vrot.lane.b32.xlu0 %v1190, 19
        %v1328 = vpop.permute.xlu0 %1327
        %1329 = vrot.lane.b32.xlu0 %v1193, 19
        %v1330 = vpop.permute.xlu0 %1329
        %1331 = vrot.lane.b32.xlu0 %v1196, 19
        %v1332 = vpop.permute.xlu0 %1331
        %1333 = vrot.lane.b32.xlu0 %v1199, 19
        %v1334 = vpop.permute.xlu0 %1333
        %1335 = vrot.lane.b32.xlu0 %v1202, 19
        %v1336 = vpop.permute.xlu0 %1335
        %1337 = vrot.lane.b32.xlu0 %v1205, 19
        %v1338 = vpop.permute.xlu0 %1337
        %1339 = vrot.lane.b32.xlu0 %v1208, 19
        %v1340 = vpop.permute.xlu0 %1339
        %1341 = vrot.lane.b32.xlu0 %v1151, 19
        %v1342 = vpop.permute.xlu0 %1341
        %1343 = vrot.lane.b32.xlu0 %v1158, 19
        %v1344 = vpop.permute.xlu0 %1343
        %1345 = vrot.lane.b32.xlu0 %v1159, 19
        %v1346 = vpop.permute.xlu0 %1345
        %1347 = vrot.lane.b32.xlu0 %v1160, 19
        %v1348 = vpop.permute.xlu0 %1347
        %v1349 = vsel %vm1265, %v1310, %v1312
        %v1350 = vsel %vm1265, %v1312, %v1314
        %v1351 = vsel %vm1265, %v1314, %v1316
        %v1352 = vsel %vm1265, %v1318, %v1320
        %v1353 = vsel %vm1265, %v1320, %v1322
        %v1354 = vsel %vm1265, %v1322, %v1324
        %v1355 = vsel %vm1265, %v1326, %v1328
        %v1356 = vsel %vm1265, %v1328, %v1330
        %v1357 = vsel %vm1265, %v1330, %v1332
        %v1358 = vsel %vm1265, %v1334, %v1336
        %v1359 = vsel %vm1265, %v1336, %v1338
        %v1360 = vsel %vm1265, %v1338, %v1340
        %v1361 = vsel %vm1265, %v1342, %v1344
        %v1362 = vsel %vm1265, %v1344, %v1346
        %v1363 = vsel %vm1265, %v1346, %v1348
        %v1376 = vld [vmem:[#allocation9] sm:$0xf]
        %v1377 = vld [vmem:[#allocation11] sm:$0xff]
        %1379 = vset.pattern.permute.xlu0 0
        %1380 = vperm.xlu0 %1379, %v1377
        %v1381 = vpop.permute.xlu0 %1380
        %v1384 = vsel %vm658, %v1376, 0
        %v1387 = vsel %vm449, %v1278, 0
        %v1390 = vsel %vm449, %v1279, 0
        %v1393 = vsel %vm449, %v1280, 0
        %v1396 = vsel %vm449, %v1361, 0
        %v1399 = vsel %vm449, %v1362, 0
        %v1402 = vsel %vm449, %v1363, 0
        %1404 = vmatprep.subr.bf16.mxu0 %v1267
        %1405 = vmatpush1.bf16.msra.mxu0 %v1266
        %1406 = vmatprep.subr.bf16.mxu0 %v1270
        %1407 = vmatpush1.bf16.msra.mxu0 %v1269
        %1408 = vmatprep.subr.bf16.mxu0 %v1273
        %1409 = vmatpush1.bf16.msra.mxu0 %v1272
        %1410 = vmatprep.subr.bf16.mxu0 %v1276
        %1411 = vmatpush1.bf16.msra.mxu0 %v1275
        %1412 = vmatprep.subr.bf16.mxu0 %v1390
        %1413 = vmatpush1.bf16.msra.mxu0 %v1387
        %1414 = vmatprep.subr.bf16.mxu0 0
        %1415 = vmatpush1.bf16.msra.mxu0 0
        %1416 = vmatprep.subr.bf16.mxu0 0
        %1417 = vmatpush1.bf16.msra.mxu0 0
        %1418 = vmatprep.subr.bf16.mxu0 0
        %1419 = vmatpush1.bf16.msra.mxu0 0
        %1420 = vmatprep.subr.bf16.mxu0 0
        %1421 = vmatpush1.bf16.msra.mxu0 0
        %1422 = vmatprep.subr.bf16.mxu0 0
        %1423 = vmatpush1.bf16.msra.mxu0 0
        %1424 = vmatprep.subr.bf16.mxu0 0
        %1425 = vmatpush1.bf16.msra.mxu0 0
        %1426 = vmatprep.subr.bf16.mxu0 0
        %1427 = vmatpush1.bf16.msra.mxu0 0
        %1428 = vmatprep.subr.bf16.mxu0 0
        %1429 = vmatpush1.bf16.msra.mxu0 0
        %1430 = vmatprep.subr.bf16.mxu0 0
        %1431 = vmatpush1.bf16.msra.mxu0 0
        %1432 = vmatprep.subr.bf16.mxu0 0
        %1433 = vmatpush1.bf16.msra.mxu0 0
        %1434 = vmatprep.subr.bf16.mxu0 0
        %1435 = vmatpush1.bf16.msra.mxu0 0
        %1436 = vmatprep.mubr.bf16.mxu0 0
        %1437 = vmatmul.mubr.bf16.gmra.mrb[0].mxu0 %v1384
        %v1438 = vpop.f32.mrb[0].mxu0
        %v1439 = vadd.f32 %v1381, %v1438
        %v1440 = vpop.f32.mrb[0].mxu0
        %v1441 = vadd.f32 %v1381, %v1440
        %v1442 = vpop.f32.mrb[0].mxu0
        %v1443 = vpop.f32.mrb[0].mxu0
        %1444 = vdwg.mxu0
        %1445 = vmatprep.subr.bf16.mxu0 %v1349
        %1446 = vmatpush1.bf16.msra.mxu0 %v1268
        %1447 = vmatprep.subr.bf16.mxu0 %v1352
        %1448 = vmatpush1.bf16.msra.mxu0 %v1271
        %1449 = vmatprep.subr.bf16.mxu0 %v1355
        %1450 = vmatpush1.bf16.msra.mxu0 %v1274
        %1451 = vmatprep.subr.bf16.mxu0 %v1358
        %1452 = vmatpush1.bf16.msra.mxu0 %v1277
        %1453 = vmatprep.subr.bf16.mxu0 %v1396
        %1454 = vmatpush1.bf16.msra.mxu0 %v1393
        %1455 = vmatprep.subr.bf16.mxu0 0
        %1456 = vmatpush1.bf16.msra.mxu0 0
        %1457 = vmatprep.subr.bf16.mxu0 0
        %1458 = vmatpush1.bf16.msra.mxu0 0
        %1459 = vmatprep.subr.bf16.mxu0 0
        %1460 = vmatpush1.bf16.msra.mxu0 0
        %1461 = vmatprep.subr.bf16.mxu0 0
        %1462 = vmatpush1.bf16.msra.mxu0 0
        %1463 = vmatprep.subr.bf16.mxu0 0
        %1464 = vmatpush1.bf16.msra.mxu0 0
        %1465 = vmatprep.subr.bf16.mxu0 0
        %1466 = vmatpush1.bf16.msra.mxu0 0
        %1467 = vmatprep.subr.bf16.mxu0 0
        %1468 = vmatpush1.bf16.msra.mxu0 0
        %1469 = vmatprep.subr.bf16.mxu0 0
        %1470 = vmatpush1.bf16.msra.mxu0 0
        %1471 = vmatprep.subr.bf16.mxu0 0
        %1472 = vmatpush1.bf16.msra.mxu0 0
        %1473 = vmatprep.subr.bf16.mxu0 0
        %1474 = vmatpush1.bf16.msra.mxu0 0
        %1475 = vmatprep.subr.bf16.mxu0 0
        %1476 = vmatpush1.bf16.msra.mxu0 0
        %1477 = vmatprep.mubr.bf16.mxu0 0
        %1478 = vmatmul.mubr.bf16.gmra.mrb[0].mxu0 %v1384
        %v1479 = vpop.f32.mrb[0].mxu0
        %v1480 = vadd.f32 %v1381, %v1479
        %v1481 = vpop.f32.mrb[0].mxu0
        %v1482 = vadd.f32 %v1381, %v1481
        %v1483 = vpop.f32.mrb[0].mxu0
        %v1484 = vpop.f32.mrb[0].mxu0
        %1485 = vdwg.mxu0
        %1486 = vmatprep.subr.bf16.mxu0 %v1351
        %1487 = vmatpush1.bf16.msra.mxu0 %v1350
        %1488 = vmatprep.subr.bf16.mxu0 %v1354
        %1489 = vmatpush1.bf16.msra.mxu0 %v1353
        %1490 = vmatprep.subr.bf16.mxu0 %v1357
        %1491 = vmatpush1.bf16.msra.mxu0 %v1356
        %1492 = vmatprep.subr.bf16.mxu0 %v1360
        %1493 = vmatpush1.bf16.msra.mxu0 %v1359
        %1494 = vmatprep.subr.bf16.mxu0 %v1402
        %1495 = vmatpush1.bf16.msra.mxu0 %v1399
        %1496 = vmatprep.subr.bf16.mxu0 0
        %1497 = vmatpush1.bf16.msra.mxu0 0
        %1498 = vmatprep.subr.bf16.mxu0 0
        %1499 = vmatpush1.bf16.msra.mxu0 0
        %1500 = vmatprep.subr.bf16.mxu0 0
        %1501 = vmatpush1.bf16.msra.mxu0 0
        %1502 = vmatprep.subr.bf16.mxu0 0
        %1503 = vmatpush1.bf16.msra.mxu0 0
        %1504 = vmatprep.subr.bf16.mxu0 0
        %1505 = vmatpush1.bf16.msra.mxu0 0
        %1506 = vmatprep.subr.bf16.mxu0 0
        %1507 = vmatpush1.bf16.msra.mxu0 0
        %1508 = vmatprep.subr.bf16.mxu0 0
        %1509 = vmatpush1.bf16.msra.mxu0 0
        %1510 = vmatprep.subr.bf16.mxu0 0
        %1511 = vmatpush1.bf16.msra.mxu0 0
        %1512 = vmatprep.subr.bf16.mxu0 0
        %1513 = vmatpush1.bf16.msra.mxu0 0
        %1514 = vmatprep.subr.bf16.mxu0 0
        %1515 = vmatpush1.bf16.msra.mxu0 0
        %1516 = vmatprep.subr.bf16.mxu0 0
        %1517 = vmatpush1.bf16.msra.mxu0 0
        %1518 = vmatprep.mubr.bf16.mxu0 0
        %1519 = vmatmul.mubr.bf16.gmra.mrb[0].mxu0 %v1384
        %v1520 = vpop.f32.mrb[0].mxu0
        %v1521 = vadd.f32 %v1381, %v1520
        %v1522 = vpop.f32.mrb[0].mxu0
        %v1523 = vadd.f32 %v1381, %v1522
        %v1524 = vpop.f32.mrb[0].mxu0
        %v1525 = vpop.f32.mrb[0].mxu0
        %1526 = vdwg.mxu0
        %v1527 = vld [vmem:[%s285] sm:$0xff]
        %v1528 = vld [vmem:[%s285 + $0x8] sm:$0xff]
        %v1529 = vld [vmem:[%s285 + $0x10] sm:$0xff]
        %v1530 = vld [vmem:[%s285 + $0x18] sm:$0xff]
        %1535 = vrot.lane.b32.xlu0 %v1527, 109
        %v1536 = vpop.permute.xlu0 %1535
        %1537 = vrot.lane.b32.xlu0 %v1528, 109
        %v1538 = vpop.permute.xlu0 %1537
        %1539 = vrot.lane.b32.xlu0 %v1529, 109
        %v1540 = vpop.permute.xlu0 %1539
        %1541 = vrot.lane.b32.xlu0 %v1530, 109
        %v1542 = vpop.permute.xlu0 %1541
        %vm1543 = vcmask 891904
        %v1544 = vsel %vm1543, %v1536, %v1538
        %v1545 = vsel %vm1543, %v1538, %v1540
        %v1546 = vsel %vm1543, %v1540, %v1542
        %v1550 = vadd.f32 %v1439, %v1544
        %v1551 = vadd.f32 %v1441, %v1545
        %v1552 = vadd.f32 %v1480, %v1546
        %1553 = vst [vmem:[%s333] sm:$0xff] %v1550
        %1554 = vst [vmem:[%s333 + $0x8] sm:$0xff] %v1551
        %1555 = vst [vmem:[%s333 + $0x10] sm:$0xff] %v1552
        %v1556 = vld [vmem:[%s498] sm:$0xff]
        %v1557 = vld [vmem:[%s498 + $0x8] sm:$0xff]
        %v1558 = vld [vmem:[%s498 + $0x10] sm:$0xff]
        %v1559 = vld [vmem:[%s498 + $0x18] sm:$0xff]
        %1564 = vrot.lane.b32.xlu0 %v1556, 109
        %v1565 = vpop.permute.xlu0 %1564
        %1566 = vrot.lane.b32.xlu0 %v1557, 109
        %v1567 = vpop.permute.xlu0 %1566
        %1568 = vrot.lane.b32.xlu0 %v1558, 109
        %v1569 = vpop.permute.xlu0 %1568
        %1570 = vrot.lane.b32.xlu0 %v1559, 109
        %v1571 = vpop.permute.xlu0 %1570
        %v1572 = vsel %vm1543, %v1565, %v1567
        %v1573 = vsel %vm1543, %v1567, %v1569
        %v1574 = vsel %vm1543, %v1569, %v1571
        %v1578 = vadd.f32 %v1482, %v1572
        %v1579 = vadd.f32 %v1521, %v1573
        %v1580 = vadd.f32 %v1523, %v1574
        %s1581 = scalar_lea.vmem %s333, 24 [#allocation14]
        %1582 = vst [vmem:[%s1581] sm:$0xff] %v1578
        %1583 = vst [vmem:[%s1581 + $0x8] sm:$0xff] %v1579
        %1584 = vst [vmem:[%s1581 + $0x10] sm:$0xff] %v1580
        %s1585 = sand.u32 %s165, 1
        %s1586 = scalar_lea.sflag [#allocation5], %s1585
        %s1587 = sand.u32 %s165, 1
        %s1588 = smul.addr %s1587, 48
        %s1589 = scalar_lea.vmem [#allocation14], %s1588
        // Predicated region
        $region69: #{resblock_forward.1} parent=43 // pred_check
          %p1590 = pneg %p175
        $region70: #{resblock_forward.1} parent=43 // pred_check_branch
          %1592 = sbr.rel (%p1590) target = $region72
        $region71: #{resblock_forward.1} parent=43 // pred_region
          %s1593 = smul.u32 2, %s26
          %s1595 = ssub.s32 768, 768
          %1596 = vsyncadd %s1586, %s1595
          %s1597 = smul.addr %s1593, 3
          %s1598 = smul.addr %s1597, 128
          %s1599 = scalar_lea.hbm %s6, %s1598
          %s1600 = sshll.u32 %s1589, 4
          %s1601 = int_to_ptr.vmem [resolvable:$true] %s1600
          %1606 = dma.vmem_to_hbm [thread:$0]  %s1601, 768, %s1599, %s1586, 384, 384, 24
        $region72: #{resblock_forward.1} parent=43 // pred_fallthru
          _
      $region44: #{resblock_forward.1} parent=5 // pred_fallthru
        _
      %p1607 = scmp.le.s32.totalorder 2, %s21
      // Predicated region
      $region73: #{resblock_forward.1} parent=5 // pred_check
        %p1608 = pneg %p1607
      $region74: #{resblock_forward.1} parent=5 // pred_check_branch
        %1610 = sbr.rel (%p1608) target = $region76
      $region75: #{resblock_forward.1} parent=5 // pred_region
        %s1611 = ssub.s32 %s21, 2
        // Predicated region
        $region77: #{resblock_forward.1} parent=75 // pred_check
          %p1612 = pneg %p181
        $region78: #{resblock_forward.1} parent=75 // pred_check_branch
          %1614 = sbr.rel (%p1612) target = $region80
        $region79: #{resblock_forward.1} parent=75 // pred_region
          %s1615 = sand.u32 %s166, 1
          %s1616 = scalar_lea.sflag [#allocation5], %s1615
          %s1617 = sand.u32 %s166, 1
          %s1618 = smul.addr %s1617, 48
          %s1619 = scalar_lea.vmem [#allocation14], %s1618
          %1620 = dma.done %s1616, 768
        $region80: #{resblock_forward.1} parent=75 // pred_fallthru
          _
      $region76: #{resblock_forward.1} parent=5 // pred_fallthru
        _
    $region6: #{resblock_forward.1} parent=1 // loop_footer
      %s25 = sadd.s32 1, %s21
    $region7: #{resblock_forward.1} parent=1 // loop_footer_branch
      %20 = sbr.rel target = $region3
    $region8: #{resblock_forward.1} parent=1 // loop_exit
      _
    %1621 = vsyncpa [#allocation4], 1
    %s1622 = scalar_lea.sflag [#allocation4], 1
    %1623 = vsyncpa %s1622, 1
    %1624 = vsyncpa [#allocation7], 1
    %1625 = vsyncpa [#allocation10], 1
    %1626 = vsyncpa [#allocation13], 1
    %1627 = vsyncpa [#allocation5], 1
    %s1628 = scalar_lea.sflag [#allocation5], 1
    %1629 = vsyncpa %s1628, 1

</llo_original>
